<compile_context>
chip_gen: v6e
topology: v6e:2x2x1
jax: 0.10.0
libtpu: 0.0.40
codegen_flags: <defaults>
</compile_context>

<pallas_src>
import functools
import math
from dataclasses import dataclass

import jax
import jax.numpy as jnp
from jax import lax
from jax.experimental import pallas as pl
from jax.experimental.pallas import tpu as pltpu

LN_EPS = 1e-5                     # torch.nn.LayerNorm default
_GELU_C = math.sqrt(2.0 / math.pi)
_MASK_VALUE = -1e30


def _vmem_limit_bytes():
    """64 MiB on v5e/v6e (128 MiB physical VMEM), 48 MiB on v7x (64 MiB)."""
    try:
        info = pltpu.get_tpu_info()
        cap = getattr(info, "vmem_capacity_bytes", 0) or 0
        if cap >= 100 * 1024 * 1024:
            return 64 * 1024 * 1024
    except Exception:
        pass
    return 48 * 1024 * 1024


VMEM_LIMIT = _vmem_limit_bytes()


@dataclass
class GPTConfig:
    block_size: int = 1024
    vocab_size: int = 50304
    n_layer: int = 12
    n_head: int = 12
    n_embd: int = 768


# --------------------------------------------------------------------------
# helpers
# --------------------------------------------------------------------------

def _gelu_tanh(x):
    # matches nn.GELU(approximate='tanh'), evaluated in f32
    return 0.5 * x * (1.0 + jnp.tanh(_GELU_C * (x + 0.044715 * x * x * x)))


def _pick_tile(dim, target, mult):
    """Largest tile <= target that is a multiple of `mult` and divides `dim`.

    target=None or dim <= target -> full dimension (always legal).
    """
    if target is None or dim <= target:
        return dim
    best = None
    t = mult
    while t <= target:
        if dim % t == 0:
            best = t
        t += mult
    return best if best is not None else dim


# --------------------------------------------------------------------------
# LayerNorm kernel (row-tiled)
# --------------------------------------------------------------------------

def _layernorm_kernel(x_ref, g_ref, b_ref, o_ref):
    x = x_ref[...].astype(jnp.float32)
    mu = jnp.mean(x, axis=-1, keepdims=True)
    var = jnp.mean(jnp.square(x - mu), axis=-1, keepdims=True)
    xn = (x - mu) * lax.rsqrt(var + LN_EPS)
    o_ref[...] = (xn * g_ref[...] + b_ref[...]).astype(o_ref.dtype)


def layernorm_op(x, gamma, beta, out_dtype=jnp.bfloat16, tm_target=512):
    M, C = x.shape
    tm = _pick_tile(M, tm_target, 16)
    return pl.pallas_call(
        _layernorm_kernel,
        grid=(M // tm,),
        in_specs=[
            pl.BlockSpec((tm, C), lambda i: (i, 0)),
            pl.BlockSpec((1, C), lambda i: (0, 0)),
            pl.BlockSpec((1, C), lambda i: (0, 0)),
        ],
        out_specs=pl.BlockSpec((tm, C), lambda i: (i, 0)),
        out_shape=jax.ShapeDtypeStruct((M, C), out_dtype),
        compiler_params=pltpu.CompilerParams(
            dimension_semantics=("parallel",),
            vmem_limit_bytes=VMEM_LIMIT),
    )(x, gamma, beta)


# --------------------------------------------------------------------------
# Generic tiled GEMM: y = act(x @ W [+ b]) [+ residual]
#   tk == K  -> single K step: weight-stationary, no acc scratch, direct write
#   tk <  K  -> split-K fallback with f32 VMEM accumulator (unused by GPT shapes)
# --------------------------------------------------------------------------

def _matmul_direct_kernel(activation, has_bias, has_res, trans_b, *refs):
    refs = list(refs)
    x_ref = refs.pop(0)
    w_ref = refs.pop(0)
    b_ref = refs.pop(0) if has_bias else None
    r_ref = refs.pop(0) if has_res else None
    o_ref = refs.pop(0)

    x = x_ref[...]
    w = w_ref[...]
    if trans_b:
        y = lax.dot_general(x, w, dimension_numbers=(((1,), (1,)), ((), ())),
                            preferred_element_type=jnp.float32)
    else:
        y = jnp.dot(x, w, preferred_element_type=jnp.float32)
    if has_bias:
        y = y + b_ref[...].astype(jnp.float32)
    if activation == "gelu":
        y = _gelu_tanh(y)
    if has_res:
        y = y + r_ref[...].astype(jnp.float32)
    o_ref[...] = y.astype(o_ref.dtype)


def _matmul_splitk_kernel(activation, has_bias, has_res, trans_b, *refs):
    refs = list(refs)
    x_ref = refs.pop(0)
    w_ref = refs.pop(0)
    b_ref = refs.pop(0) if has_bias else None
    r_ref = refs.pop(0) if has_res else None
    o_ref = refs.pop(0)
    acc_ref = refs.pop(0)

    @pl.when(pl.program_id(2) == 0)
    def _init():
        acc_ref[...] = jnp.zeros(acc_ref.shape, jnp.float32)

    x = x_ref[...]
    w = w_ref[...]
    if trans_b:
        acc_ref[...] += lax.dot_general(
            x, w, dimension_numbers=(((1,), (1,)), ((), ())),
            preferred_element_type=jnp.float32)
    else:
        acc_ref[...] += jnp.dot(x, w, preferred_element_type=jnp.float32)

    @pl.when(pl.program_id(2) == pl.num_programs(2) - 1)
    def _finalize():
        y = acc_ref[...]
        if has_bias:
            y = y + b_ref[...].astype(jnp.float32)
        if activation == "gelu":
            y = _gelu_tanh(y)
        if has_res:
            y = y + r_ref[...].astype(jnp.float32)
        o_ref[...] = y.astype(o_ref.dtype)


def matmul_op(x, w, *, bias=None, residual=None, activation="none",
              trans_b=False, out_dtype=jnp.bfloat16,
              tm_target=512, tn_target=None, tk_target=None):
    M, K = x.shape
    if trans_b:
        N = w.shape[0]
        assert w.shape[1] == K
    else:
        assert w.shape[0] == K
        N = w.shape[1]

    tm = _pick_tile(M, tm_target, 16)    # 16-row multiples -> full bf16 packing
    tn = _pick_tile(N, tn_target, 128)
    tk = _pick_tile(K, tk_target, 128)

    has_bias = bias is not None
    has_res = residual is not None
    args = [x, w]
    if has_bias:
        args.append(bias)
    if has_res:
        args.append(residual)

    flops = 2 * M * N * K
    bytes_accessed = int(M * K * x.dtype.itemsize + w.size * w.dtype.itemsize
                         + M * N * jnp.dtype(out_dtype).itemsize)
    cost = pl.CostEstimate(flops=flops, transcendentals=0,
                           bytes_accessed=bytes_accessed)

    if tk == K:
        # ---- single-K-step path: weight block resident, direct output write.
        grid = (M // tm, N // tn)
        in_specs = [pl.BlockSpec((tm, K), lambda i, j: (i, 0))]
        if trans_b:
            in_specs.append(pl.BlockSpec((tn, K), lambda i, j: (j, 0)))
        else:
            in_specs.append(pl.BlockSpec((K, tn), lambda i, j: (0, j)))
        if has_bias:
            in_specs.append(pl.BlockSpec((1, tn), lambda i, j: (0, j)))
        if has_res:
            in_specs.append(pl.BlockSpec((tm, tn), lambda i, j: (i, j)))
        kernel = functools.partial(_matmul_direct_kernel, activation,
                                   has_bias, has_res, trans_b)
        return pl.pallas_call(
            kernel,
            grid=grid,
            in_specs=in_specs,
            out_specs=pl.BlockSpec((tm, tn), lambda i, j: (i, j)),
            out_shape=jax.ShapeDtypeStruct((M, N), out_dtype),
            compiler_params=pltpu.CompilerParams(
                dimension_semantics=("parallel", "parallel"),
                vmem_limit_bytes=VMEM_LIMIT),
            cost_estimate=cost,
        )(*args)

    # ---- split-K fallback (not hit for GPT-2 sized layers).
    grid = (M // tm, N // tn, K // tk)
    in_specs = [pl.BlockSpec((tm, tk), lambda i, j, k: (i, k))]
    if trans_b:
        in_specs.append(pl.BlockSpec((tn, tk), lambda i, j, k: (j, k)))
    else:
        in_specs.append(pl.BlockSpec((tk, tn), lambda i, j, k: (k, j)))
    if has_bias:
        in_specs.append(pl.BlockSpec((1, tn), lambda i, j, k: (0, j)))
    if has_res:
        in_specs.append(pl.BlockSpec((tm, tn), lambda i, j, k: (i, j)))
    kernel = functools.partial(_matmul_splitk_kernel, activation,
                               has_bias, has_res, trans_b)
    return pl.pallas_call(
        kernel,
        grid=grid,
        in_specs=in_specs,
        out_specs=pl.BlockSpec((tm, tn), lambda i, j, k: (i, j)),
        out_shape=jax.ShapeDtypeStruct((M, N), out_dtype),
        scratch_shapes=[pltpu.VMEM((tm, tn), jnp.float32)],
        compiler_params=pltpu.CompilerParams(
            dimension_semantics=("parallel", "parallel", "arbitrary"),
            vmem_limit_bytes=VMEM_LIMIT),
        cost_estimate=cost,
    )(*args)


# --------------------------------------------------------------------------
# Flash attention kernel (causal, online softmax)
# --------------------------------------------------------------------------

def _flash_attn_kernel(tq, tkv, scale,
                       q_ref, k_ref, v_ref, o_ref,
                       m_sc, l_sc, acc_sc):
    kv_idx = pl.program_id(2)
    q_start = pl.program_id(1) * tq
    kv_start = kv_idx * tkv

    @pl.when(kv_idx == 0)
    def _init():
        m_sc[...] = jnp.full(m_sc.shape, -jnp.inf, jnp.float32)
        l_sc[...] = jnp.zeros(l_sc.shape, jnp.float32)
        acc_sc[...] = jnp.zeros(acc_sc.shape, jnp.float32)

    q = q_ref[0, :, :]     # (tq, hd)  bf16
    k = k_ref[0, :, :]     # (tkv, hd) bf16
    v = v_ref[0, :, :]     # (tkv, hd) bf16

    def update(mask):
        s = lax.dot_general(q, k, dimension_numbers=(((1,), (1,)), ((), ())),
                            preferred_element_type=jnp.float32) * scale
        if mask is not None:
            s = jnp.where(mask, s, jnp.float32(_MASK_VALUE))
        m_prev = m_sc[...]
        m_new = jnp.maximum(m_prev, jnp.max(s, axis=-1, keepdims=True))
        alpha = jnp.exp(m_prev - m_new)
        p = jnp.exp(s - m_new)
        l_sc[...] = alpha * l_sc[...] + jnp.sum(p, axis=-1, keepdims=True)
        acc_sc[...] = alpha * acc_sc[...] + jnp.dot(
            p.astype(v.dtype), v, preferred_element_type=jnp.float32)
        m_sc[...] = m_new

    # Tile classification: fully visible (below diagonal, no mask), partial
    # (straddles diagonal, element mask), fully masked (skipped entirely —
    # its K/V DMA is also skipped via the clamped index_map).
    fully_visible = kv_start + tkv <= q_start + 1
    partial = jnp.logical_and(kv_start < q_start + tq,
                              jnp.logical_not(fully_visible))

    @pl.when(fully_visible)
    def _full():
        update(None)

    @pl.when(partial)
    def _masked():
        rows = q_start + lax.broadcasted_iota(jnp.int32, (tq, tkv), 0)
        cols = kv_start + lax.broadcasted_iota(jnp.int32, (tq, tkv), 1)
        update(cols <= rows)

    @pl.when(kv_idx == pl.num_programs(2) - 1)
    def _finalize():
        # exact divide for parity with torch's softmax (no EUP approx recip)
        o_ref[0, :, :] = (acc_sc[...] / l_sc[...]).astype(o_ref.dtype)


def flash_attention_op(q, k, v, tq_target=512):
    """q, k, v: (B*n_head, T, hd) bf16 -> (B*n_head, T, hd) bf16."""
    BH, T, hd = q.shape
    t_blk = _pick_tile(T, tq_target, 128)
    scale = 1.0 / math.sqrt(hd)
    grid = (BH, T // t_blk, T // t_blk)
    kernel = functools.partial(_flash_attn_kernel, t_blk, t_blk, scale)

    def kv_index_map(b, i, j):
        # Causal clamp: for fully-masked tiles (j > i) re-use the previous
        # block index so Pallas skips the K/V HBM DMA entirely.
        return (b, jnp.minimum(i, j), 0)

    return pl.pallas_call(
        kernel,
        grid=grid,
        in_specs=[
            pl.BlockSpec((1, t_blk, hd), lambda b, i, j: (b, i, 0)),
            pl.BlockSpec((1, t_blk, hd), kv_index_map),
            pl.BlockSpec((1, t_blk, hd), kv_index_map),
        ],
        out_specs=pl.BlockSpec((1, t_blk, hd), lambda b, i, j: (b, i, 0)),
        out_shape=jax.ShapeDtypeStruct((BH, T, hd), jnp.bfloat16),
        scratch_shapes=[
            pltpu.VMEM((t_blk, 1), jnp.float32),    # running max
            pltpu.VMEM((t_blk, 1), jnp.float32),    # running sum
            pltpu.VMEM((t_blk, hd), jnp.float32),   # output accumulator
        ],
        compiler_params=pltpu.CompilerParams(
            dimension_semantics=("parallel", "parallel", "arbitrary"),
            vmem_limit_bytes=VMEM_LIMIT),
    )(q, k, v)


# --------------------------------------------------------------------------
# Model glue
# --------------------------------------------------------------------------

def transformer_block(x, p, n_head):
    B, T, C = x.shape
    M = B * T
    hd = C // n_head
    xr = x.reshape(M, C)                                    # f32 residual stream

    # ---- attention sub-block ----
    xn = layernorm_op(xr, p['ln1_w'], p['ln1_b'])           # (M, C) bf16
    qkv = matmul_op(xn, p['w_qkv'], bias=p['b_qkv'])        # (M, 3C) bf16, weight-stationary
    qkv = qkv.reshape(B, T, 3, n_head, hd)

    def to_bh(t):                                           # (B,T,H,hd)->(B*H,T,hd)
        return jnp.transpose(t, (0, 2, 1, 3)).reshape(B * n_head, T, hd)

    y = flash_attention_op(to_bh(qkv[:, :, 0]),
                           to_bh(qkv[:, :, 1]),
                           to_bh(qkv[:, :, 2]))             # (B*H, T, hd) bf16
    y = jnp.transpose(y.reshape(B, n_head, T, hd), (0, 2, 1, 3)).reshape(M, C)

    xr = matmul_op(y, p['w_attn_proj'], bias=p['b_attn_proj'],
                   residual=xr, out_dtype=jnp.float32)      # x + attn(ln1(x))

    # ---- mlp sub-block ----
    xn2 = layernorm_op(xr, p['ln2_w'], p['ln2_b'])
    h = matmul_op(xn2, p['w_fc'], bias=p['b_fc'], activation="gelu")
    xr = matmul_op(h, p['w_mlp_proj'], bias=p['b_mlp_proj'],
                   residual=xr, out_dtype=jnp.float32)      # x + mlp(ln2(x))
    return xr.reshape(B, T, C)


def final_logits(x, lnf_w, lnf_b, wte):
    """ln_f(x) @ wte.T, contracted in-kernel (no transposed copy of wte).

    wte is streamed M/tm times (tm=1024); the x row tile stays resident across
    vocab column tiles.
    """
    B, T, C = x.shape
    V = wte.shape[0]
    xn = layernorm_op(x.reshape(B * T, C), lnf_w, lnf_b)
    # TODO(synk): when only the loss is needed, fuse log-softmax/CE into this
    # kernel (or emit bf16 logits) to halve/remove the f32 logits HBM write;
    # kept f32 here because forward() must return full-precision logits.
    logits = matmul_op(xn, wte, trans_b=True, out_dtype=jnp.float32,
                       tm_target=1024, tn_target=512, tk_target=None)
    return logits.reshape(B, T, V)


def gpt_forward(idx, params, cfg, targets=None):
    """Matches GPT.forward: returns (logits, loss); loss=None if no targets."""
    B, T = idx.shape
    assert T <= cfg.block_size
    # Embedding gathers are plain-JAX glue (wte stored bf16 because it doubles
    # as the tied lm_head MXU weight; residual stream kept f32).
    tok_emb = params['wte'][idx].astype(jnp.float32)        # (B, T, C)
    pos_emb = params['wpe'][:T]                             # (T, C) f32
    x = tok_emb + pos_emb[None, :, :]
    for blk in params['blocks']:
        x = transformer_block(x, blk, cfg.n_head)
    logits = final_logits(x, params['ln_f_w'], params['ln_f_b'], params['wte'])
    loss = None
    if targets is not None:
        logp = jax.nn.log_softmax(logits.reshape(-1, logits.shape[-1]), axis=-1)
        loss = -jnp.mean(jnp.take_along_axis(
            logp, targets.reshape(-1, 1), axis=-1))
    return logits, loss


# --------------------------------------------------------------------------
# deterministic init (mirrors GPT._init_weights; weights stored bf16 for MXU)
# --------------------------------------------------------------------------

def init_params(key, cfg):
    std = 0.02
    proj_std = 0.02 * (2 * cfg.n_layer) ** -0.5   # NANGPT_SCALE_INIT (attn c_proj)
    C = cfg.n_embd
    bf16 = jnp.bfloat16

    def nrm(k, shape, s, dtype):
        return (s * jax.random.normal(k, shape)).astype(dtype)

    keys = iter(jax.random.split(key, 2 + 4 * cfg.n_layer))
    params = {
        'wte': nrm(next(keys), (cfg.vocab_size, C), std, bf16),  # tied lm_head
        'wpe': nrm(next(keys), (cfg.block_size, C), std, jnp.float32),
        'ln_f_w': jnp.ones((1, C), jnp.float32),
        'ln_f_b': jnp.zeros((1, C), jnp.float32),
        'blocks': [],
    }
    for _ in range(cfg.n_layer):
        blk = {
            'ln1_w': jnp.ones((1, C), jnp.float32),
            'ln1_b': jnp.zeros((1, C), jnp.float32),
            'w_qkv': nrm(next(keys), (C, 3 * C), std, bf16),
            'b_qkv': jnp.zeros((1, 3 * C), jnp.float32),
            'w_attn_proj': nrm(next(keys), (C, C), proj_std, bf16),
            'b_attn_proj': jnp.zeros((1, C), jnp.float32),
            'ln2_w': jnp.ones((1, C), jnp.float32),
            'ln2_b': jnp.zeros((1, C), jnp.float32),
            'w_fc': nrm(next(keys), (C, 4 * C), std, bf16),
            'b_fc': jnp.zeros((1, 4 * C), jnp.float32),
            # torch checks 'NANGPT_SCALE_INIT' (attn proj only); mlp c_proj has
            # the misspelled 'NANOGPT_SCALE_INIT', so it uses std=0.02.
            'w_mlp_proj': nrm(next(keys), (4 * C, C), std, bf16),
            'b_mlp_proj': jnp.zeros((1, C), jnp.float32),
        }
        params['blocks'].append(blk)
    return params


# --------------------------------------------------------------------------
# main
# --------------------------------------------------------------------------

if __name__ == "__main__":
    cfg = GPTConfig(block_size=16, vocab_size=128, n_layer=2, n_head=2, n_embd=32)

    root = jax.random.PRNGKey(0)
    k_params, k_idx = jax.random.split(root)
    params = init_params(k_params, cfg)

    B, T = 2, 8
    idx = jax.random.randint(k_idx, (B, T), 0, cfg.vocab_size, dtype=jnp.int32)

    fwd = jax.jit(functools.partial(gpt_forward, cfg=cfg))
    logits, loss = fwd(idx, params)
    logits = jax.block_until_ready(logits)

    assert logits.shape == (B, T, cfg.vocab_size)
    assert logits.dtype == jnp.float32
    assert bool(jnp.isfinite(logits).all())
    assert loss is None
    print("KERNEL_OK")
</pallas_src>

<mosaic_0001>
module attributes {stable_mosaic.version = 11 : i64} {
  func.func @_matmul_direct_kernel(%arg0: i32, %arg1: i32, %arg2: memref<16x32xbf16, #tpu.memory_space<vmem>>, %arg3: memref<32x96xbf16, #tpu.memory_space<vmem>>, %arg4: memref<1x96xf32, #tpu.memory_space<vmem>>, %arg5: memref<16x96xbf16, #tpu.memory_space<vmem>>) attributes {dimension_semantics = [#tpu.dimension_semantics<parallel>, #tpu.dimension_semantics<parallel>], iteration_bounds = array<i64: 1, 1>, scalar_prefetch = 0 : i64, scratch_operands = 0 : i64, tpu.core_type = #tpu.core_type<tc>, window_params = [{transform_indices = @transform_0, window_bounds = array<i64: 16, 32>}, {transform_indices = @transform_1, window_bounds = array<i64: 32, 96>}, {transform_indices = @transform_2, window_bounds = array<i64: 1, 96>}, {transform_indices = @transform_3, window_bounds = array<i64: 16, 96>}]} {
    %c0 = arith.constant 0 : index
    %c0_0 = arith.constant 0 : index
    %0 = vector.load %arg2[%c0, %c0_0] : memref<16x32xbf16, #tpu.memory_space<vmem>>, vector<16x32xbf16>
    %c0_1 = arith.constant 0 : index
    %c0_2 = arith.constant 0 : index
    %1 = vector.load %arg3[%c0_1, %c0_2] : memref<32x96xbf16, #tpu.memory_space<vmem>>, vector<32x96xbf16>
    %cst = arith.constant dense<0.000000e+00> : vector<16x96xf32>
    %2 = tpu.matmul %0, %1, %cst {dimension_numbers = #tpu.dot_dimension_numbers<[1], [0], [0], [1], [0, 0, 1, 1], [], []>} : vector<16x32xbf16>, vector<32x96xbf16>, vector<16x96xf32> -> vector<16x96xf32>
    %c0_3 = arith.constant 0 : index
    %c0_4 = arith.constant 0 : index
    %3 = vector.load %arg4[%c0_3, %c0_4] : memref<1x96xf32, #tpu.memory_space<vmem>>, vector<1x96xf32>
    %4 = vector.broadcast %3 : vector<1x96xf32> to vector<16x96xf32>
    %5 = arith.addf %2, %4 : vector<16x96xf32>
    %6 = arith.truncf %5 : vector<16x96xf32> to vector<16x96xbf16>
    %c0_5 = arith.constant 0 : index
    %c0_6 = arith.constant 0 : index
    %7 = vector.load %arg5[%c0_5, %c0_6] : memref<16x96xbf16, #tpu.memory_space<vmem>>, vector<16x96xbf16>
    tpu.vector_store %arg5[%c0_5, %c0_6], %6 {strides = array<i32>} : memref<16x96xbf16, #tpu.memory_space<vmem>>, vector<16x96xbf16>,
    return
  }
  func.func @transform_0(%arg0: i32, %arg1: i32) -> (i32, i32) {
    %c0_i32 = arith.constant 0 : i32
    %c0_i32_0 = arith.constant 0 : i32
    return %arg0, %c0_i32 : i32, i32
  }
  func.func @transform_1(%arg0: i32, %arg1: i32) -> (i32, i32) {
    %c0_i32 = arith.constant 0 : i32
    %c0_i32_0 = arith.constant 0 : i32
    return %c0_i32, %arg1 : i32, i32
  }
  func.func @transform_2(%arg0: i32, %arg1: i32) -> (i32, i32) {
    %c0_i32 = arith.constant 0 : i32
    %c0_i32_0 = arith.constant 0 : i32
    return %c0_i32, %arg1 : i32, i32
  }
  func.func @transform_3(%arg0: i32, %arg1: i32) -> (i32, i32) {
    %c0_i32 = arith.constant 0 : i32
    return %arg0, %arg1 : i32, i32
  }
}

module attributes {stable_mosaic.version = 11 : i64} {
  func.func @_layernorm_kernel(%arg0: i32, %arg1: memref<16x32xf32, #tpu.memory_space<vmem>>, %arg2: memref<1x32xf32, #tpu.memory_space<vmem>>, %arg3: memref<1x32xf32, #tpu.memory_space<vmem>>, %arg4: memref<16x32xbf16, #tpu.memory_space<vmem>>) attributes {dimension_semantics = [#tpu.dimension_semantics<parallel>], iteration_bounds = array<i64: 1>, scalar_prefetch = 0 : i64, scratch_operands = 0 : i64, tpu.core_type = #tpu.core_type<tc>, window_params = [{transform_indices = @transform_0, window_bounds = array<i64: 16, 32>}, {pipeline_mode = #tpu.pipeline_mode<synchronous>, transform_indices = @transform_1, window_bounds = array<i64: 1, 32>}, {pipeline_mode = #tpu.pipeline_mode<synchronous>, transform_indices = @transform_2, window_bounds = array<i64: 1, 32>}, {transform_indices = @transform_3, window_bounds = array<i64: 16, 32>}]} {
    %c0 = arith.constant 0 : index
    %c0_0 = arith.constant 0 : index
    %0 = vector.load %arg1[%c0, %c0_0] : memref<16x32xf32, #tpu.memory_space<vmem>>, vector<16x32xf32>
    %cst = arith.constant dense<0.000000e+00> : vector<16xf32>
    %1 = vector.multi_reduction <add>, %0, %cst [1] : vector<16x32xf32> to vector<16xf32>
    %2 = vector.shape_cast %1 : vector<16xf32> to vector<16x1xf32>
    %cst_1 = arith.constant 3.200000e+01 : f32
    %3 = vector.broadcast %cst_1 : f32 to vector<16x1xf32>
    %4 = arith.divf %2, %3 : vector<16x1xf32>
    %5 = vector.broadcast %4 : vector<16x1xf32> to vector<16x32xf32>
    %6 = arith.subf %0, %5 : vector<16x32xf32>
    %7 = arith.mulf %6, %6 : vector<16x32xf32>
    %cst_2 = arith.constant dense<0.000000e+00> : vector<16xf32>
    %8 = vector.multi_reduction <add>, %7, %cst_2 [1] : vector<16x32xf32> to vector<16xf32>
    %9 = vector.shape_cast %8 : vector<16xf32> to vector<16x1xf32>
    %cst_3 = arith.constant 3.200000e+01 : f32
    %10 = vector.broadcast %cst_3 : f32 to vector<16x1xf32>
    %11 = arith.divf %9, %10 : vector<16x1xf32>
    %12 = vector.broadcast %4 : vector<16x1xf32> to vector<16x32xf32>
    %13 = arith.subf %0, %12 : vector<16x32xf32>
    %cst_4 = arith.constant 9.99999974E-6 : f32
    %14 = vector.broadcast %cst_4 : f32 to vector<16x1xf32>
    %15 = arith.addf %11, %14 : vector<16x1xf32>
    %16 = math.rsqrt %15 : vector<16x1xf32>
    %17 = vector.broadcast %16 : vector<16x1xf32> to vector<16x32xf32>
    %18 = arith.mulf %13, %17 : vector<16x32xf32>
    %c0_5 = arith.constant 0 : index
    %c0_6 = arith.constant 0 : index
    %19 = vector.load %arg2[%c0_5, %c0_6] : memref<1x32xf32, #tpu.memory_space<vmem>>, vector<1x32xf32>
    %20 = vector.broadcast %19 : vector<1x32xf32> to vector<16x32xf32>
    %21 = arith.mulf %18, %20 : vector<16x32xf32>
    %c0_7 = arith.constant 0 : index
    %c0_8 = arith.constant 0 : index
    %22 = vector.load %arg3[%c0_7, %c0_8] : memref<1x32xf32, #tpu.memory_space<vmem>>, vector<1x32xf32>
    %23 = vector.broadcast %22 : vector<1x32xf32> to vector<16x32xf32>
    %24 = arith.addf %21, %23 : vector<16x32xf32>
    %25 = arith.truncf %24 : vector<16x32xf32> to vector<16x32xbf16>
    %c0_9 = arith.constant 0 : index
    %c0_10 = arith.constant 0 : index
    %26 = vector.load %arg4[%c0_9, %c0_10] : memref<16x32xbf16, #tpu.memory_space<vmem>>, vector<16x32xbf16>
    tpu.vector_store %arg4[%c0_9, %c0_10], %25 {strides = array<i32>} : memref<16x32xbf16, #tpu.memory_space<vmem>>, vector<16x32xbf16>,
    return
  }
  func.func @transform_0(%arg0: i32) -> (i32, i32) {
    %c0_i32 = arith.constant 0 : i32
    %c0_i32_0 = arith.constant 0 : i32
    return %arg0, %c0_i32 : i32, i32
  }
  func.func @transform_1(%arg0: i32) -> (i32, i32) {
    %c0_i32 = arith.constant 0 : i32
    %c0_i32_0 = arith.constant 0 : i32
    %c0_i32_1 = arith.constant 0 : i32
    return %c0_i32, %c0_i32_0 : i32, i32
  }
  func.func @transform_2(%arg0: i32) -> (i32, i32) {
    %c0_i32 = arith.constant 0 : i32
    %c0_i32_0 = arith.constant 0 : i32
    %c0_i32_1 = arith.constant 0 : i32
    return %c0_i32, %c0_i32_0 : i32, i32
  }
  func.func @transform_3(%arg0: i32) -> (i32, i32) {
    %c0_i32 = arith.constant 0 : i32
    %c0_i32_0 = arith.constant 0 : i32
    return %arg0, %c0_i32 : i32, i32
  }
}

module attributes {stable_mosaic.version = 11 : i64} {
  func.func @_flash_attn_kernel(%arg0: i32, %arg1: i32, %arg2: i32, %arg3: memref<1x8x16xbf16, #tpu.memory_space<vmem>>, %arg4: memref<1x8x16xbf16, #tpu.memory_space<vmem>>, %arg5: memref<1x8x16xbf16, #tpu.memory_space<vmem>>, %arg6: memref<1x8x16xbf16, #tpu.memory_space<vmem>>, %arg7: memref<8x1xf32, #tpu.memory_space<vmem>>, %arg8: memref<8x1xf32, #tpu.memory_space<vmem>>, %arg9: memref<8x16xf32, #tpu.memory_space<vmem>>) attributes {dimension_semantics = [#tpu.dimension_semantics<parallel>, #tpu.dimension_semantics<parallel>, #tpu.dimension_semantics<arbitrary>], iteration_bounds = array<i64: 4, 1, 1>, scalar_prefetch = 0 : i64, scratch_operands = 3 : i64, tpu.core_type = #tpu.core_type<tc>, window_params = [{transform_indices = @transform_0, window_bounds = array<i64: 1, 8, 16>}, {transform_indices = @transform_1, window_bounds = array<i64: 1, 8, 16>}, {transform_indices = @transform_2, window_bounds = array<i64: 1, 8, 16>}, {transform_indices = @transform_3, window_bounds = array<i64: 1, 8, 16>}]} {
    %c8_i32 = arith.constant 8 : i32
    %0 = arith.muli %arg1, %c8_i32 : i32
    %c8_i32_0 = arith.constant 8 : i32
    %1 = arith.muli %arg2, %c8_i32_0 : i32
    %c0_i32 = arith.constant 0 : i32
    %2 = arith.cmpi eq, %arg2, %c0_i32 : i32
    %3 = arith.extui %2 : i1 to i32
    %c0_i32_1 = arith.constant 0 : i32
    %4 = arith.cmpi ne, %3, %c0_i32_1 : i32
    scf.if %4 {
      %cst = arith.constant 0xFF800000 : f32
      %25 = vector.broadcast %cst : f32 to vector<8x1xf32>
      %c0_16 = arith.constant 0 : index
      %c0_17 = arith.constant 0 : index
      %26 = vector.load %arg7[%c0_16, %c0_17] : memref<8x1xf32, #tpu.memory_space<vmem>>, vector<8x1xf32>
      tpu.vector_store %arg7[%c0_16, %c0_17], %25 {strides = array<i32>} : memref<8x1xf32, #tpu.memory_space<vmem>>, vector<8x1xf32>,
      %cst_18 = arith.constant 0.000000e+00 : f32
      %27 = vector.broadcast %cst_18 : f32 to vector<8x1xf32>
      %c0_19 = arith.constant 0 : index
      %c0_20 = arith.constant 0 : index
      %28 = vector.load %arg8[%c0_19, %c0_20] : memref<8x1xf32, #tpu.memory_space<vmem>>, vector<8x1xf32>
      tpu.vector_store %arg8[%c0_19, %c0_20], %27 {strides = array<i32>} : memref<8x1xf32, #tpu.memory_space<vmem>>, vector<8x1xf32>,
      %cst_21 = arith.constant 0.000000e+00 : f32
      %29 = vector.broadcast %cst_21 : f32 to vector<8x16xf32>
      %c0_22 = arith.constant 0 : index
      %c0_23 = arith.constant 0 : index
      %30 = vector.load %arg9[%c0_22, %c0_23] : memref<8x16xf32, #tpu.memory_space<vmem>>, vector<8x16xf32>
      tpu.vector_store %arg9[%c0_22, %c0_23], %29 {strides = array<i32>} : memref<8x16xf32, #tpu.memory_space<vmem>>, vector<8x16xf32>,
    } else {
    }
    %c0 = arith.constant 0 : index
    %c0_2 = arith.constant 0 : index
    %c0_3 = arith.constant 0 : index
    %5 = vector.load %arg3[%c0, %c0_2, %c0_3] : memref<1x8x16xbf16, #tpu.memory_space<vmem>>, vector<1x8x16xbf16>
    %6 = vector.shape_cast %5 : vector<1x8x16xbf16> to vector<8x16xbf16>
    %c0_4 = arith.constant 0 : index
    %c0_5 = arith.constant 0 : index
    %c0_6 = arith.constant 0 : index
    %7 = vector.load %arg4[%c0_4, %c0_5, %c0_6] : memref<1x8x16xbf16, #tpu.memory_space<vmem>>, vector<1x8x16xbf16>
    %8 = vector.shape_cast %7 : vector<1x8x16xbf16> to vector<8x16xbf16>
    %c0_7 = arith.constant 0 : index
    %c0_8 = arith.constant 0 : index
    %c0_9 = arith.constant 0 : index
    %9 = vector.load %arg5[%c0_7, %c0_8, %c0_9] : memref<1x8x16xbf16, #tpu.memory_space<vmem>>, vector<1x8x16xbf16>
    %10 = vector.shape_cast %9 : vector<1x8x16xbf16> to vector<8x16xbf16>
    %c8_i32_10 = arith.constant 8 : i32
    %11 = arith.addi %1, %c8_i32_10 : i32
    %c1_i32 = arith.constant 1 : i32
    %12 = arith.addi %0, %c1_i32 : i32
    %13 = arith.cmpi sle, %11, %12 : i32
    %c8_i32_11 = arith.constant 8 : i32
    %14 = arith.addi %0, %c8_i32_11 : i32
    %15 = arith.cmpi slt, %1, %14 : i32
    %true = arith.constant true
    %16 = arith.xori %13, %true : i1
    %17 = arith.andi %15, %16 : i1
    %18 = arith.extui %13 : i1 to i32
    %c0_i32_12 = arith.constant 0 : i32
    %19 = arith.cmpi ne, %18, %c0_i32_12 : i32
    scf.if %19 {
      %cst = arith.constant dense<0.000000e+00> : vector<8x8xf32>
      %25 = tpu.matmul %6, %8, %cst {dimension_numbers = #tpu.dot_dimension_numbers<[1], [1], [0], [0], [0, 0, 1, 0], [], []>} : vector<8x16xbf16>, vector<8x16xbf16>, vector<8x8xf32> -> vector<8x8xf32>
      %cst_16 = arith.constant 2.500000e-01 : f32
      %26 = vector.broadcast %cst_16 : f32 to vector<8x8xf32>
      %27 = arith.mulf %25, %26 : vector<8x8xf32>
      %c0_17 = arith.constant 0 : index
      %c0_18 = arith.constant 0 : index
      %28 = vector.load %arg7[%c0_17, %c0_18] : memref<8x1xf32, #tpu.memory_space<vmem>>, vector<8x1xf32>
      %cst_19 = arith.constant dense<0xFF800000> : vector<8xf32>
      %29 = vector.multi_reduction <maximumf>, %27, %cst_19 [1] : vector<8x8xf32> to vector<8xf32>
      %30 = vector.shape_cast %29 : vector<8xf32> to vector<8x1xf32>
      %31 = arith.maximumf %28, %30 : vector<8x1xf32>
      %32 = arith.subf %28, %31 : vector<8x1xf32>
      %33 = math.exp %32 : vector<8x1xf32>
      %34 = vector.broadcast %31 : vector<8x1xf32> to vector<8x8xf32>
      %35 = arith.subf %27, %34 : vector<8x8xf32>
      %36 = math.exp %35 : vector<8x8xf32>
      %c0_20 = arith.constant 0 : index
      %c0_21 = arith.constant 0 : index
      %37 = vector.load %arg8[%c0_20, %c0_21] : memref<8x1xf32, #tpu.memory_space<vmem>>, vector<8x1xf32>
      %38 = arith.mulf %33, %37 : vector<8x1xf32>
      %cst_22 = arith.constant dense<0.000000e+00> : vector<8xf32>
      %39 = vector.multi_reduction <add>, %36, %cst_22 [1] : vector<8x8xf32> to vector<8xf32>
      %40 = vector.shape_cast %39 : vector<8xf32> to vector<8x1xf32>
      %41 = arith.addf %38, %40 : vector<8x1xf32>
      %c0_23 = arith.constant 0 : index
      %c0_24 = arith.constant 0 : index
      %42 = vector.load %arg8[%c0_23, %c0_24] : memref<8x1xf32, #tpu.memory_space<vmem>>, vector<8x1xf32>
      tpu.vector_store %arg8[%c0_23, %c0_24], %41 {strides = array<i32>} : memref<8x1xf32, #tpu.memory_space<vmem>>, vector<8x1xf32>,
      %c0_25 = arith.constant 0 : index
      %c0_26 = arith.constant 0 : index
      %43 = vector.load %arg9[%c0_25, %c0_26] : memref<8x16xf32, #tpu.memory_space<vmem>>, vector<8x16xf32>
      %44 = vector.broadcast %33 : vector<8x1xf32> to vector<8x16xf32>
      %45 = arith.mulf %44, %43 : vector<8x16xf32>
      %46 = arith.truncf %36 : vector<8x8xf32> to vector<8x8xbf16>
      %cst_27 = arith.constant dense<0.000000e+00> : vector<8x16xf32>
      %47 = tpu.matmul %46, %10, %cst_27 {dimension_numbers = #tpu.dot_dimension_numbers<[1], [0], [0], [1], [0, 0, 1, 1], [], []>} : vector<8x8xbf16>, vector<8x16xbf16>, vector<8x16xf32> -> vector<8x16xf32>
      %48 = arith.addf %45, %47 : vector<8x16xf32>
      %c0_28 = arith.constant 0 : index
      %c0_29 = arith.constant 0 : index
      %49 = vector.load %arg9[%c0_28, %c0_29] : memref<8x16xf32, #tpu.memory_space<vmem>>, vector<8x16xf32>
      tpu.vector_store %arg9[%c0_28, %c0_29], %48 {strides = array<i32>} : memref<8x16xf32, #tpu.memory_space<vmem>>, vector<8x16xf32>,
      %c0_30 = arith.constant 0 : index
      %c0_31 = arith.constant 0 : index
      %50 = vector.load %arg7[%c0_30, %c0_31] : memref<8x1xf32, #tpu.memory_space<vmem>>, vector<8x1xf32>
      tpu.vector_store %arg7[%c0_30, %c0_31], %31 {strides = array<i32>} : memref<8x1xf32, #tpu.memory_space<vmem>>, vector<8x1xf32>,
    } else {
    }
    %20 = arith.extui %17 : i1 to i32
    %c0_i32_13 = arith.constant 0 : i32
    %21 = arith.cmpi ne, %20, %c0_i32_13 : i32
    scf.if %21 {
      %25 = tpu.iota {dimensions = array<i32: 0>} : vector<8x8xi32>
      %26 = vector.broadcast %0 : i32 to vector<8x8xi32>
      %27 = arith.addi %26, %25 : vector<8x8xi32>
      %28 = tpu.iota {dimensions = array<i32: 1>} : vector<8x8xi32>
      %29 = vector.broadcast %1 : i32 to vector<8x8xi32>
      %30 = arith.addi %29, %28 : vector<8x8xi32>
      %31 = arith.cmpi sle, %30, %27 : vector<8x8xi32>
      %cst = arith.constant dense<0.000000e+00> : vector<8x8xf32>
      %32 = tpu.matmul %6, %8, %cst {dimension_numbers = #tpu.dot_dimension_numbers<[1], [1], [0], [0], [0, 0, 1, 0], [], []>} : vector<8x16xbf16>, vector<8x16xbf16>, vector<8x8xf32> -> vector<8x8xf32>
      %cst_16 = arith.constant 2.500000e-01 : f32
      %33 = vector.broadcast %cst_16 : f32 to vector<8x8xf32>
      %34 = arith.mulf %32, %33 : vector<8x8xf32>
      %cst_17 = arith.constant -1.000000e+30 : f32
      %35 = vector.broadcast %cst_17 : f32 to vector<8x8xf32>
      %36 = arith.select %31, %34, %35 : vector<8x8xi1>, vector<8x8xf32>
      %c0_18 = arith.constant 0 : index
      %c0_19 = arith.constant 0 : index
      %37 = vector.load %arg7[%c0_18, %c0_19] : memref<8x1xf32, #tpu.memory_space<vmem>>, vector<8x1xf32>
      %cst_20 = arith.constant dense<0xFF800000> : vector<8xf32>
      %38 = vector.multi_reduction <maximumf>, %36, %cst_20 [1] : vector<8x8xf32> to vector<8xf32>
      %39 = vector.shape_cast %38 : vector<8xf32> to vector<8x1xf32>
      %40 = arith.maximumf %37, %39 : vector<8x1xf32>
      %41 = arith.subf %37, %40 : vector<8x1xf32>
      %42 = math.exp %41 : vector<8x1xf32>
      %43 = vector.broadcast %40 : vector<8x1xf32> to vector<8x8xf32>
      %44 = arith.subf %36, %43 : vector<8x8xf32>
      %45 = math.exp %44 : vector<8x8xf32>
      %c0_21 = arith.constant 0 : index
      %c0_22 = arith.constant 0 : index
      %46 = vector.load %arg8[%c0_21, %c0_22] : memref<8x1xf32, #tpu.memory_space<vmem>>, vector<8x1xf32>
      %47 = arith.mulf %42, %46 : vector<8x1xf32>
      %cst_23 = arith.constant dense<0.000000e+00> : vector<8xf32>
      %48 = vector.multi_reduction <add>, %45, %cst_23 [1] : vector<8x8xf32> to vector<8xf32>
      %49 = vector.shape_cast %48 : vector<8xf32> to vector<8x1xf32>
      %50 = arith.addf %47, %49 : vector<8x1xf32>
      %c0_24 = arith.constant 0 : index
      %c0_25 = arith.constant 0 : index
      %51 = vector.load %arg8[%c0_24, %c0_25] : memref<8x1xf32, #tpu.memory_space<vmem>>, vector<8x1xf32>
      tpu.vector_store %arg8[%c0_24, %c0_25], %50 {strides = array<i32>} : memref<8x1xf32, #tpu.memory_space<vmem>>, vector<8x1xf32>,
      %c0_26 = arith.constant 0 : index
      %c0_27 = arith.constant 0 : index
      %52 = vector.load %arg9[%c0_26, %c0_27] : memref<8x16xf32, #tpu.memory_space<vmem>>, vector<8x16xf32>
      %53 = vector.broadcast %42 : vector<8x1xf32> to vector<8x16xf32>
      %54 = arith.mulf %53, %52 : vector<8x16xf32>
      %55 = arith.truncf %45 : vector<8x8xf32> to vector<8x8xbf16>
      %cst_28 = arith.constant dense<0.000000e+00> : vector<8x16xf32>
      %56 = tpu.matmul %55, %10, %cst_28 {dimension_numbers = #tpu.dot_dimension_numbers<[1], [0], [0], [1], [0, 0, 1, 1], [], []>} : vector<8x8xbf16>, vector<8x16xbf16>, vector<8x16xf32> -> vector<8x16xf32>
      %57 = arith.addf %54, %56 : vector<8x16xf32>
      %c0_29 = arith.constant 0 : index
      %c0_30 = arith.constant 0 : index
      %58 = vector.load %arg9[%c0_29, %c0_30] : memref<8x16xf32, #tpu.memory_space<vmem>>, vector<8x16xf32>
      tpu.vector_store %arg9[%c0_29, %c0_30], %57 {strides = array<i32>} : memref<8x16xf32, #tpu.memory_space<vmem>>, vector<8x16xf32>,
      %c0_31 = arith.constant 0 : index
      %c0_32 = arith.constant 0 : index
      %59 = vector.load %arg7[%c0_31, %c0_32] : memref<8x1xf32, #tpu.memory_space<vmem>>, vector<8x1xf32>
      tpu.vector_store %arg7[%c0_31, %c0_32], %40 {strides = array<i32>} : memref<8x1xf32, #tpu.memory_space<vmem>>, vector<8x1xf32>,
    } else {
    }
    %c0_i32_14 = arith.constant 0 : i32
    %22 = arith.cmpi eq, %arg2, %c0_i32_14 : i32
    %23 = arith.extui %22 : i1 to i32
    %c0_i32_15 = arith.constant 0 : i32
    %24 = arith.cmpi ne, %23, %c0_i32_15 : i32
    scf.if %24 {
      %c0_16 = arith.constant 0 : index
      %c0_17 = arith.constant 0 : index
      %25 = vector.load %arg9[%c0_16, %c0_17] : memref<8x16xf32, #tpu.memory_space<vmem>>, vector<8x16xf32>
      %c0_18 = arith.constant 0 : index
      %c0_19 = arith.constant 0 : index
      %26 = vector.load %arg8[%c0_18, %c0_19] : memref<8x1xf32, #tpu.memory_space<vmem>>, vector<8x1xf32>
      %27 = vector.broadcast %26 : vector<8x1xf32> to vector<8x16xf32>
      %28 = arith.divf %25, %27 : vector<8x16xf32>
      %29 = arith.truncf %28 : vector<8x16xf32> to vector<8x16xbf16>
      %c0_20 = arith.constant 0 : index
      %c0_21 = arith.constant 0 : index
      %c0_22 = arith.constant 0 : index
      %30 = vector.load %arg6[%c0_20, %c0_21, %c0_22] : memref<1x8x16xbf16, #tpu.memory_space<vmem>>, vector<1x8x16xbf16>
      %31 = vector.shape_cast %30 : vector<1x8x16xbf16> to vector<8x16xbf16>
      %32 = vector.shape_cast %29 : vector<8x16xbf16> to vector<1x8x16xbf16>
      tpu.vector_store %arg6[%c0_20, %c0_21, %c0_22], %32 {strides = array<i32>} : memref<1x8x16xbf16, #tpu.memory_space<vmem>>, vector<1x8x16xbf16>,
    } else {
    }
    return
  }
  func.func @transform_0(%arg0: i32, %arg1: i32, %arg2: i32) -> (i32, i32, i32) {
    %c0_i32 = arith.constant 0 : i32
    %c0_i32_0 = arith.constant 0 : i32
    return %arg0, %arg1, %c0_i32 : i32, i32, i32
  }
  func.func @transform_1(%arg0: i32, %arg1: i32, %arg2: i32) -> (i32, i32, i32) {
    %0 = arith.minsi %arg1, %arg2 : i32
    %c0_i32 = arith.constant 0 : i32
    %c0_i32_0 = arith.constant 0 : i32
    return %arg0, %0, %c0_i32 : i32, i32, i32
  }
  func.func @transform_2(%arg0: i32, %arg1: i32, %arg2: i32) -> (i32, i32, i32) {
    %0 = arith.minsi %arg1, %arg2 : i32
    %c0_i32 = arith.constant 0 : i32
    %c0_i32_0 = arith.constant 0 : i32
    return %arg0, %0, %c0_i32 : i32, i32, i32
  }
  func.func @transform_3(%arg0: i32, %arg1: i32, %arg2: i32) -> (i32, i32, i32) {
    %c0_i32 = arith.constant 0 : i32
    %c0_i32_0 = arith.constant 0 : i32
    return %arg0, %arg1, %c0_i32 : i32, i32, i32
  }
}

module attributes {stable_mosaic.version = 11 : i64} {
  func.func @_matmul_direct_kernel(%arg0: i32, %arg1: i32, %arg2: memref<16x32xbf16, #tpu.memory_space<vmem>>, %arg3: memref<32x32xbf16, #tpu.memory_space<vmem>>, %arg4: memref<1x32xf32, #tpu.memory_space<vmem>>, %arg5: memref<16x32xf32, #tpu.memory_space<vmem>>, %arg6: memref<16x32xf32, #tpu.memory_space<vmem>>) attributes {dimension_semantics = [#tpu.dimension_semantics<parallel>, #tpu.dimension_semantics<parallel>], iteration_bounds = array<i64: 1, 1>, scalar_prefetch = 0 : i64, scratch_operands = 0 : i64, tpu.core_type = #tpu.core_type<tc>, window_params = [{transform_indices = @transform_0, window_bounds = array<i64: 16, 32>}, {transform_indices = @transform_1, window_bounds = array<i64: 32, 32>}, {transform_indices = @transform_2, window_bounds = array<i64: 1, 32>}, {transform_indices = @transform_3, window_bounds = array<i64: 16, 32>}, {transform_indices = @transform_4, window_bounds = array<i64: 16, 32>}]} {
    %c0 = arith.constant 0 : index
    %c0_0 = arith.constant 0 : index
    %0 = vector.load %arg2[%c0, %c0_0] : memref<16x32xbf16, #tpu.memory_space<vmem>>, vector<16x32xbf16>
    %c0_1 = arith.constant 0 : index
    %c0_2 = arith.constant 0 : index
    %1 = vector.load %arg3[%c0_1, %c0_2] : memref<32x32xbf16, #tpu.memory_space<vmem>>, vector<32x32xbf16>
    %cst = arith.constant dense<0.000000e+00> : vector<16x32xf32>
    %2 = tpu.matmul %0, %1, %cst {dimension_numbers = #tpu.dot_dimension_numbers<[1], [0], [0], [1], [0, 0, 1, 1], [], []>} : vector<16x32xbf16>, vector<32x32xbf16>, vector<16x32xf32> -> vector<16x32xf32>
    %c0_3 = arith.constant 0 : index
    %c0_4 = arith.constant 0 : index
    %3 = vector.load %arg4[%c0_3, %c0_4] : memref<1x32xf32, #tpu.memory_space<vmem>>, vector<1x32xf32>
    %4 = vector.broadcast %3 : vector<1x32xf32> to vector<16x32xf32>
    %5 = arith.addf %2, %4 : vector<16x32xf32>
    %c0_5 = arith.constant 0 : index
    %c0_6 = arith.constant 0 : index
    %6 = vector.load %arg5[%c0_5, %c0_6] : memref<16x32xf32, #tpu.memory_space<vmem>>, vector<16x32xf32>
    %7 = arith.addf %5, %6 : vector<16x32xf32>
    %c0_7 = arith.constant 0 : index
    %c0_8 = arith.constant 0 : index
    %8 = vector.load %arg6[%c0_7, %c0_8] : memref<16x32xf32, #tpu.memory_space<vmem>>, vector<16x32xf32>
    tpu.vector_store %arg6[%c0_7, %c0_8], %7 {strides = array<i32>} : memref<16x32xf32, #tpu.memory_space<vmem>>, vector<16x32xf32>,
    return
  }
  func.func @transform_0(%arg0: i32, %arg1: i32) -> (i32, i32) {
    %c0_i32 = arith.constant 0 : i32
    %c0_i32_0 = arith.constant 0 : i32
    return %arg0, %c0_i32 : i32, i32
  }
  func.func @transform_1(%arg0: i32, %arg1: i32) -> (i32, i32) {
    %c0_i32 = arith.constant 0 : i32
    %c0_i32_0 = arith.constant 0 : i32
    return %c0_i32, %arg1 : i32, i32
  }
  func.func @transform_2(%arg0: i32, %arg1: i32) -> (i32, i32) {
    %c0_i32 = arith.constant 0 : i32
    %c0_i32_0 = arith.constant 0 : i32
    return %c0_i32, %arg1 : i32, i32
  }
  func.func @transform_3(%arg0: i32, %arg1: i32) -> (i32, i32) {
    %c0_i32 = arith.constant 0 : i32
    return %arg0, %arg1 : i32, i32
  }
  func.func @transform_4(%arg0: i32, %arg1: i32) -> (i32, i32) {
    %c0_i32 = arith.constant 0 : i32
    return %arg0, %arg1 : i32, i32
  }
}

module attributes {stable_mosaic.version = 11 : i64} {
  func.func @_matmul_direct_kernel(%arg0: i32, %arg1: i32, %arg2: memref<16x128xbf16, #tpu.memory_space<vmem>>, %arg3: memref<128x32xbf16, #tpu.memory_space<vmem>>, %arg4: memref<1x32xf32, #tpu.memory_space<vmem>>, %arg5: memref<16x32xf32, #tpu.memory_space<vmem>>, %arg6: memref<16x32xf32, #tpu.memory_space<vmem>>) attributes {dimension_semantics = [#tpu.dimension_semantics<parallel>, #tpu.dimension_semantics<parallel>], iteration_bounds = array<i64: 1, 1>, scalar_prefetch = 0 : i64, scratch_operands = 0 : i64, tpu.core_type = #tpu.core_type<tc>, window_params = [{transform_indices = @transform_0, window_bounds = array<i64: 16, 128>}, {transform_indices = @transform_1, window_bounds = array<i64: 128, 32>}, {transform_indices = @transform_2, window_bounds = array<i64: 1, 32>}, {transform_indices = @transform_3, window_bounds = array<i64: 16, 32>}, {transform_indices = @transform_4, window_bounds = array<i64: 16, 32>}]} {
    %c0 = arith.constant 0 : index
    %c0_0 = arith.constant 0 : index
    %0 = vector.load %arg2[%c0, %c0_0] : memref<16x128xbf16, #tpu.memory_space<vmem>>, vector<16x128xbf16>
    %c0_1 = arith.constant 0 : index
    %c0_2 = arith.constant 0 : index
    %1 = vector.load %arg3[%c0_1, %c0_2] : memref<128x32xbf16, #tpu.memory_space<vmem>>, vector<128x32xbf16>
    %cst = arith.constant dense<0.000000e+00> : vector<16x32xf32>
    %2 = tpu.matmul %0, %1, %cst {dimension_numbers = #tpu.dot_dimension_numbers<[1], [0], [0], [1], [0, 0, 1, 1], [], []>} : vector<16x128xbf16>, vector<128x32xbf16>, vector<16x32xf32> -> vector<16x32xf32>
    %c0_3 = arith.constant 0 : index
    %c0_4 = arith.constant 0 : index
    %3 = vector.load %arg4[%c0_3, %c0_4] : memref<1x32xf32, #tpu.memory_space<vmem>>, vector<1x32xf32>
    %4 = vector.broadcast %3 : vector<1x32xf32> to vector<16x32xf32>
    %5 = arith.addf %2, %4 : vector<16x32xf32>
    %c0_5 = arith.constant 0 : index
    %c0_6 = arith.constant 0 : index
    %6 = vector.load %arg5[%c0_5, %c0_6] : memref<16x32xf32, #tpu.memory_space<vmem>>, vector<16x32xf32>
    %7 = arith.addf %5, %6 : vector<16x32xf32>
    %c0_7 = arith.constant 0 : index
    %c0_8 = arith.constant 0 : index
    %8 = vector.load %arg6[%c0_7, %c0_8] : memref<16x32xf32, #tpu.memory_space<vmem>>, vector<16x32xf32>
    tpu.vector_store %arg6[%c0_7, %c0_8], %7 {strides = array<i32>} : memref<16x32xf32, #tpu.memory_space<vmem>>, vector<16x32xf32>,
    return
  }
  func.func @transform_0(%arg0: i32, %arg1: i32) -> (i32, i32) {
    %c0_i32 = arith.constant 0 : i32
    %c0_i32_0 = arith.constant 0 : i32
    return %arg0, %c0_i32 : i32, i32
  }
  func.func @transform_1(%arg0: i32, %arg1: i32) -> (i32, i32) {
    %c0_i32 = arith.constant 0 : i32
    %c0_i32_0 = arith.constant 0 : i32
    return %c0_i32, %arg1 : i32, i32
  }
  func.func @transform_2(%arg0: i32, %arg1: i32) -> (i32, i32) {
    %c0_i32 = arith.constant 0 : i32
    %c0_i32_0 = arith.constant 0 : i32
    return %c0_i32, %arg1 : i32, i32
  }
  func.func @transform_3(%arg0: i32, %arg1: i32) -> (i32, i32) {
    %c0_i32 = arith.constant 0 : i32
    return %arg0, %arg1 : i32, i32
  }
  func.func @transform_4(%arg0: i32, %arg1: i32) -> (i32, i32) {
    %c0_i32 = arith.constant 0 : i32
    return %arg0, %arg1 : i32, i32
  }
}

module attributes {stable_mosaic.version = 11 : i64} {
  func.func @_matmul_direct_kernel(%arg0: i32, %arg1: i32, %arg2: memref<16x32xbf16, #tpu.memory_space<vmem>>, %arg3: memref<32x128xbf16, #tpu.memory_space<vmem>>, %arg4: memref<1x128xf32, #tpu.memory_space<vmem>>, %arg5: memref<16x128xbf16, #tpu.memory_space<vmem>>) attributes {dimension_semantics = [#tpu.dimension_semantics<parallel>, #tpu.dimension_semantics<parallel>], iteration_bounds = array<i64: 1, 1>, scalar_prefetch = 0 : i64, scratch_operands = 0 : i64, tpu.core_type = #tpu.core_type<tc>, window_params = [{transform_indices = @transform_0, window_bounds = array<i64: 16, 32>}, {transform_indices = @transform_1, window_bounds = array<i64: 32, 128>}, {transform_indices = @transform_2, window_bounds = array<i64: 1, 128>}, {transform_indices = @transform_3, window_bounds = array<i64: 16, 128>}]} {
    %c0 = arith.constant 0 : index
    %c0_0 = arith.constant 0 : index
    %0 = vector.load %arg2[%c0, %c0_0] : memref<16x32xbf16, #tpu.memory_space<vmem>>, vector<16x32xbf16>
    %c0_1 = arith.constant 0 : index
    %c0_2 = arith.constant 0 : index
    %1 = vector.load %arg3[%c0_1, %c0_2] : memref<32x128xbf16, #tpu.memory_space<vmem>>, vector<32x128xbf16>
    %cst = arith.constant dense<0.000000e+00> : vector<16x128xf32>
    %2 = tpu.matmul %0, %1, %cst {dimension_numbers = #tpu.dot_dimension_numbers<[1], [0], [0], [1], [0, 0, 1, 1], [], []>} : vector<16x32xbf16>, vector<32x128xbf16>, vector<16x128xf32> -> vector<16x128xf32>
    %c0_3 = arith.constant 0 : index
    %c0_4 = arith.constant 0 : index
    %3 = vector.load %arg4[%c0_3, %c0_4] : memref<1x128xf32, #tpu.memory_space<vmem>>, vector<1x128xf32>
    %4 = vector.broadcast %3 : vector<1x128xf32> to vector<16x128xf32>
    %5 = arith.addf %2, %4 : vector<16x128xf32>
    %cst_5 = arith.constant 5.000000e-01 : f32
    %6 = vector.broadcast %cst_5 : f32 to vector<16x128xf32>
    %7 = arith.mulf %6, %5 : vector<16x128xf32>
    %cst_6 = arith.constant 4.471500e-02 : f32
    %8 = vector.broadcast %cst_6 : f32 to vector<16x128xf32>
    %9 = arith.mulf %8, %5 : vector<16x128xf32>
    %10 = arith.mulf %9, %5 : vector<16x128xf32>
    %11 = arith.mulf %10, %5 : vector<16x128xf32>
    %12 = arith.addf %5, %11 : vector<16x128xf32>
    %cst_7 = arith.constant 0.797884583 : f32
    %13 = vector.broadcast %cst_7 : f32 to vector<16x128xf32>
    %14 = arith.mulf %13, %12 : vector<16x128xf32>
    %15 = math.tanh %14 : vector<16x128xf32>
    %cst_8 = arith.constant 1.000000e+00 : f32
    %16 = vector.broadcast %cst_8 : f32 to vector<16x128xf32>
    %17 = arith.addf %16, %15 : vector<16x128xf32>
    %18 = arith.mulf %7, %17 : vector<16x128xf32>
    %19 = arith.truncf %18 : vector<16x128xf32> to vector<16x128xbf16>
    %c0_9 = arith.constant 0 : index
    %c0_10 = arith.constant 0 : index
    %20 = vector.load %arg5[%c0_9, %c0_10] : memref<16x128xbf16, #tpu.memory_space<vmem>>, vector<16x128xbf16>
    tpu.vector_store %arg5[%c0_9, %c0_10], %19 {strides = array<i32>} : memref<16x128xbf16, #tpu.memory_space<vmem>>, vector<16x128xbf16>,
    return
  }
  func.func @transform_0(%arg0: i32, %arg1: i32) -> (i32, i32) {
    %c0_i32 = arith.constant 0 : i32
    %c0_i32_0 = arith.constant 0 : i32
    return %arg0, %c0_i32 : i32, i32
  }
  func.func @transform_1(%arg0: i32, %arg1: i32) -> (i32, i32) {
    %c0_i32 = arith.constant 0 : i32
    %c0_i32_0 = arith.constant 0 : i32
    return %c0_i32, %arg1 : i32, i32
  }
  func.func @transform_2(%arg0: i32, %arg1: i32) -> (i32, i32) {
    %c0_i32 = arith.constant 0 : i32
    %c0_i32_0 = arith.constant 0 : i32
    return %c0_i32, %arg1 : i32, i32
  }
  func.func @transform_3(%arg0: i32, %arg1: i32) -> (i32, i32) {
    %c0_i32 = arith.constant 0 : i32
    return %arg0, %arg1 : i32, i32
  }
}

module attributes {stable_mosaic.version = 11 : i64} {
  func.func @_matmul_direct_kernel(%arg0: i32, %arg1: i32, %arg2: memref<16x32xbf16, #tpu.memory_space<vmem>>, %arg3: memref<128x32xbf16, #tpu.memory_space<vmem>>, %arg4: memref<16x128xf32, #tpu.memory_space<vmem>>) attributes {dimension_semantics = [#tpu.dimension_semantics<parallel>, #tpu.dimension_semantics<parallel>], iteration_bounds = array<i64: 1, 1>, scalar_prefetch = 0 : i64, scratch_operands = 0 : i64, tpu.core_type = #tpu.core_type<tc>, window_params = [{transform_indices = @transform_0, window_bounds = array<i64: 16, 32>}, {transform_indices = @transform_1, window_bounds = array<i64: 128, 32>}, {transform_indices = @transform_2, window_bounds = array<i64: 16, 128>}]} {
    %c0 = arith.constant 0 : index
    %c0_0 = arith.constant 0 : index
    %0 = vector.load %arg2[%c0, %c0_0] : memref<16x32xbf16, #tpu.memory_space<vmem>>, vector<16x32xbf16>
    %c0_1 = arith.constant 0 : index
    %c0_2 = arith.constant 0 : index
    %1 = vector.load %arg3[%c0_1, %c0_2] : memref<128x32xbf16, #tpu.memory_space<vmem>>, vector<128x32xbf16>
    %cst = arith.constant dense<0.000000e+00> : vector<16x128xf32>
    %2 = tpu.matmul %0, %1, %cst {dimension_numbers = #tpu.dot_dimension_numbers<[1], [1], [0], [0], [0, 0, 1, 0], [], []>} : vector<16x32xbf16>, vector<128x32xbf16>, vector<16x128xf32> -> vector<16x128xf32>
    %c0_3 = arith.constant 0 : index
    %c0_4 = arith.constant 0 : index
    %3 = vector.load %arg4[%c0_3, %c0_4] : memref<16x128xf32, #tpu.memory_space<vmem>>, vector<16x128xf32>
    tpu.vector_store %arg4[%c0_3, %c0_4], %2 {strides = array<i32>} : memref<16x128xf32, #tpu.memory_space<vmem>>, vector<16x128xf32>,
    return
  }
  func.func @transform_0(%arg0: i32, %arg1: i32) -> (i32, i32) {
    %c0_i32 = arith.constant 0 : i32
    %c0_i32_0 = arith.constant 0 : i32
    return %arg0, %c0_i32 : i32, i32
  }
  func.func @transform_1(%arg0: i32, %arg1: i32) -> (i32, i32) {
    %c0_i32 = arith.constant 0 : i32
    %c0_i32_0 = arith.constant 0 : i32
    return %arg1, %c0_i32 : i32, i32
  }
  func.func @transform_2(%arg0: i32, %arg1: i32) -> (i32, i32) {
    %c0_i32 = arith.constant 0 : i32
    return %arg0, %arg1 : i32, i32
  }
}

</mosaic_0001>

<llo_original>
// kernel: gpt_forward.16
$region0: #{gpt_forward.16}
  #allocation0 [shape = 'u32[]', space=smem, size = 0x4, offset = 0x4, fixed_abs, tag = 'smem constant byte address 0x4 - core index']
  #allocation1 [shape = 'u32[144,128]{1,0:T(1,128)}', space=vmem, size = 0x12000, scoped, tag = 'internal scratch']
  %s0 = inlined_call_operand.vmem [shape: f32[16,32], index: 0, kind: input, shape index: {}]
  %s1 = inlined_call_operand.vmem [shape: f32[1,32], index: 1, kind: input, shape index: {}]
  %s2 = inlined_call_operand.vmem [shape: f32[1,32], index: 2, kind: input, shape index: {}]
  %s3 = inlined_call_operand.vmem [shape: bf16[16,32], index: 3, kind: output, shape index: {}]
  %s4 = sld [smem:[#allocation0]]
  $region22: #{gpt_forward.16} parent=0
    _
  %s6 = ssub.s32 1, %s4
  %s7 = scalar_select 0, %s6, %s4
  // Predicated region
  $region2: #{gpt_forward.16} parent=0 // pred_check
    _
  $region3: #{gpt_forward.16} parent=0 // pred_check_branch
    %9 = sbr.rel (0) target = $region5
  $region4: #{gpt_forward.16} parent=0 // pred_region
    _
  $region5: #{gpt_forward.16} parent=0 // pred_fallthru
    _
  // Predicated region
  $region6: #{gpt_forward.16} parent=0 // pred_check
    _
  $region7: #{gpt_forward.16} parent=0 // pred_check_branch
    %11 = sbr.rel (0) target = $region9
  $region8: #{gpt_forward.16} parent=0 // pred_region
    _
  $region9: #{gpt_forward.16} parent=0 // pred_fallthru
    _
  // Predicated region
  $region10: #{gpt_forward.16} parent=0 // pred_check
    _
  $region11: #{gpt_forward.16} parent=0 // pred_check_branch
    %13 = sbr.rel (0) target = $region13
  $region12: #{gpt_forward.16} parent=0 // pred_region
    _
  $region13: #{gpt_forward.16} parent=0 // pred_fallthru
    _
  %v14 = vld [vmem:[%s0] sm:$0xff]
  %v15 = vld [vmem:[%s0 + $0x8] sm:$0xff]
  %vm16 = vcmask 261120
  %v17 = vsel %vm16, %v14, 0.0
  %18 = vadd.xlane.f32.xlu0 %v17
  %v19 = vpop.xlane.xlu0 %18
  %v20 = vsel %vm16, %v15, 0.0
  %21 = vadd.xlane.f32.xlu0 %v20
  %v22 = vpop.xlane.xlu0 %21
  %v23 = vrcp.pop 32.0
  %v24 = vmul.f32 %v19, %v23
  %v25 = vmul.f32 %v22, %v23
  %v26 = vsub.f32 %v14, %v24
  %v27 = vsub.f32 %v15, %v25
  %v28 = vmul.f32 %v26, %v26
  %v29 = vmul.f32 %v27, %v27
  %v30 = vsel %vm16, %v28, 0.0
  %31 = vadd.xlane.f32.xlu0 %v30
  %v32 = vpop.xlane.xlu0 %31
  %v33 = vsel %vm16, %v29, 0.0
  %34 = vadd.xlane.f32.xlu0 %v33
  %v35 = vpop.xlane.xlu0 %34
  %v36 = vmul.f32 %v32, %v23
  %v37 = vmul.f32 %v35, %v23
  %v38 = vadd.f32 %v36, 1e-05
  %v39 = vadd.f32 %v37, 1e-05
  %v40 = vrsqrt.pop %v38
  %v41 = vrsqrt.pop %v39
  %v42 = vmul.f32 %v26, %v40
  %v43 = vmul.f32 %v27, %v41
  %v44 = vld [vmem:[%s1] sm:$0x1]
  %v46 = vlaneseq
  %v47 = vshrl.u32 %v46, 7
  %v48 = vsub.s32 0, %v47
  %v49 = vrot.slane %v44, %v48
  %v51 = vmul.f32 %v42, %v49
  %v52 = vmul.f32 %v43, %v49
  %v53 = vld [vmem:[%s2] sm:$0x1]
  %v55 = vlaneseq
  %v56 = vshrl.u32 %v55, 7
  %v57 = vsub.s32 0, %v56
  %v58 = vrot.slane %v53, %v57
  %v60 = vadd.f32 %v51, %v58
  %v61 = vadd.f32 %v52, %v58
  %v62 = vpack.c.bf16 %v61, %v60
  %v64 = vunpack.c.l.b16 %v62
  %v65 = vunpack.c.h.b16 %v62
  %v66 = vpack.c.b16 %v64, %v64
  %v67 = vpack.c.b16 %v65, %v65
  %vm70 = vcmask 257024
  %71 = vst.msk [vmem:[%s3] sm:$0xf] %vm70, %v66
  %72 = vst.msk [vmem:[%s3 + $0x4] sm:$0xf] %vm70, %v67
  // Predicated region
  $region14: #{gpt_forward.16} parent=0 // pred_check
    _
  $region15: #{gpt_forward.16} parent=0 // pred_check_branch
    %74 = sbr.rel (0) target = $region17
  $region16: #{gpt_forward.16} parent=0 // pred_region
    _
  $region17: #{gpt_forward.16} parent=0 // pred_fallthru
    _
  // Predicated region
  $region18: #{gpt_forward.16} parent=0 // pred_check
    _
  $region19: #{gpt_forward.16} parent=0 // pred_check_branch
    %76 = sbr.rel (0) target = $region21
  $region20: #{gpt_forward.16} parent=0 // pred_region
    _
  $region21: #{gpt_forward.16} parent=0 // pred_fallthru
    _

// kernel: gpt_forward.17
$region0: #{gpt_forward.17}
  #allocation0 [shape = 'u32[]', space=smem, size = 0x4, offset = 0x4, fixed_abs, tag = 'smem constant byte address 0x4 - core index']
  #allocation1 [shape = 'u32[144,128]{1,0:T(1,128)}', space=vmem, size = 0x12000, scoped, tag = 'internal scratch']
  %s0 = inlined_call_operand.vmem [shape: bf16[16,32], index: 0, kind: input, shape index: {}]
  %s1 = inlined_call_operand.vmem [shape: bf16[32,96], index: 1, kind: input, shape index: {}]
  %s2 = inlined_call_operand.vmem [shape: f32[1,96], index: 2, kind: input, shape index: {}]
  %s3 = inlined_call_operand.vmem [shape: bf16[16,96], index: 3, kind: output, shape index: {}]
  %s4 = sld [smem:[#allocation0]]
  $region22: #{gpt_forward.17} parent=0
    _
  %s6 = ssub.s32 1, %s4
  %s7 = scalar_select 0, %s6, %s4
  // Predicated region
  $region2: #{gpt_forward.17} parent=0 // pred_check
    _
  $region3: #{gpt_forward.17} parent=0 // pred_check_branch
    %9 = sbr.rel (0) target = $region5
  $region4: #{gpt_forward.17} parent=0 // pred_region
    _
  $region5: #{gpt_forward.17} parent=0 // pred_fallthru
    _
  // Predicated region
  $region6: #{gpt_forward.17} parent=0 // pred_check
    _
  $region7: #{gpt_forward.17} parent=0 // pred_check_branch
    %11 = sbr.rel (0) target = $region9
  $region8: #{gpt_forward.17} parent=0 // pred_region
    _
  $region9: #{gpt_forward.17} parent=0 // pred_fallthru
    _
  // Predicated region
  $region10: #{gpt_forward.17} parent=0 // pred_check
    _
  $region11: #{gpt_forward.17} parent=0 // pred_check_branch
    %13 = sbr.rel (0) target = $region13
  $region12: #{gpt_forward.17} parent=0 // pred_region
    _
  $region13: #{gpt_forward.17} parent=0 // pred_fallthru
    _
  %v15 = vld [vmem:[%s0] sm:$0xf]
  %v16 = vld [vmem:[%s0 + $0x4] sm:$0xf]
  %v17 = vld [vmem:[%s1] sm:$0xf]
  %v18 = vld [vmem:[%s1 + $0x4] sm:$0xf]
  %v19 = vld [vmem:[%s1 + $0x8] sm:$0xf]
  %v20 = vld [vmem:[%s1 + $0xc] sm:$0xf]
  %v21 = vld [vmem:[%s2] sm:$0x1]
  %v23 = vlaneseq
  %v24 = vshrl.u32 %v23, 7
  %v25 = vsub.s32 0, %v24
  %v26 = vrot.slane %v21, %v25
  %v30 = vunpack.c.l.b16 %v15
  %v31 = vunpack.c.l.b16 %v16
  %v32 = vpack.c.b16 %v31, %v30
  %v37 = vunpack.c.l.b16 %v17
  %v38 = vunpack.c.l.b16 %v18
  %v39 = vunpack.c.l.b16 %v19
  %v40 = vunpack.c.l.b16 %v20
  %v41 = vpack.c.b16 %v38, %v37
  %v42 = vpack.c.b16 %v40, %v39
  %vm45 = vcmask 261120
  %v47 = vsel %vm45, %v32, 0
  %49 = vmatprep.subr.bf16.mxu0 0
  %50 = vmatpush1.bf16.msra.mxu0 0
  %51 = vmatprep.subr.bf16.mxu0 0
  %52 = vmatpush1.bf16.msra.mxu0 0
  %53 = vmatprep.subr.bf16.mxu0 0
  %54 = vmatpush1.bf16.msra.mxu0 0
  %55 = vmatprep.subr.bf16.mxu0 0
  %56 = vmatpush1.bf16.msra.mxu0 0
  %57 = vmatprep.subr.bf16.mxu0 0
  %58 = vmatpush1.bf16.msra.mxu0 0
  %59 = vmatprep.subr.bf16.mxu0 0
  %60 = vmatpush1.bf16.msra.mxu0 0
  %61 = vmatprep.subr.bf16.mxu0 0
  %62 = vmatpush1.bf16.msra.mxu0 %v42
  %63 = vmatprep.subr.bf16.mxu0 0
  %64 = vmatpush1.bf16.msra.mxu0 %v41
  %65 = vmatprep.subr.bf16.mxu0 0
  %66 = vmatpush2.bf16.msra.mxu0 0
  %67 = vmatprep.subr.bf16.mxu0 0
  %68 = vmatpush2.bf16.msra.mxu0 0
  %69 = vmatprep.subr.bf16.mxu0 0
  %70 = vmatpush2.bf16.msra.mxu0 0
  %71 = vmatprep.subr.bf16.mxu0 0
  %72 = vmatpush2.bf16.msra.mxu0 0
  %73 = vmatprep.subr.bf16.mxu0 0
  %74 = vmatpush2.bf16.msra.mxu0 0
  %75 = vmatprep.subr.bf16.mxu0 0
  %76 = vmatpush2.bf16.msra.mxu0 0
  %77 = vmatprep.subr.bf16.mxu0 0
  %78 = vmatpush2.bf16.msra.mxu0 0
  %79 = vmatprep.subr.bf16.mxu0 0
  %80 = vmatpush2.bf16.msra.mxu0 0
  %81 = vmatprep.mubr.bf16.mxu0 0
  %82 = vmatmul.mubr.bf16.gmra.mxu0 %v47
  %v83 = vpop.f32.mrf.mxu0
  %v84 = vadd.f32 %v26, %v83
  %v85 = vpop.f32.mrf.mxu0
  %v86 = vpop.f32.mrf.mxu0
  %v87 = vadd.f32 %v26, %v86
  %v88 = vpop.f32.mrf.mxu0
  %89 = vdwg.mxu0
  %v90 = vpack.c.bf16 %v87, %v84
  %v92 = vunpack.c.l.b16 %v90
  %v93 = vunpack.c.h.b16 %v90
  %v94 = vpack.c.b16 %v92, %v92
  %v95 = vpack.c.b16 %v93, %v93
  %vm98 = vcmask 781312
  %99 = vst.msk [vmem:[%s3] sm:$0xf] %vm98, %v94
  %100 = vst.msk [vmem:[%s3 + $0x4] sm:$0xf] %vm98, %v95
  // Predicated region
  $region14: #{gpt_forward.17} parent=0 // pred_check
    _
  $region15: #{gpt_forward.17} parent=0 // pred_check_branch
    %102 = sbr.rel (0) target = $region17
  $region16: #{gpt_forward.17} parent=0 // pred_region
    _
  $region17: #{gpt_forward.17} parent=0 // pred_fallthru
    _
  // Predicated region
  $region18: #{gpt_forward.17} parent=0 // pred_check
    _
  $region19: #{gpt_forward.17} parent=0 // pred_check_branch
    %104 = sbr.rel (0) target = $region21
  $region20: #{gpt_forward.17} parent=0 // pred_region
    _
  $region21: #{gpt_forward.17} parent=0 // pred_fallthru
    _

// kernel: gpt_forward.18
$region0: #{gpt_forward.18}
  #allocation0 [shape = 'u32[]', space=smem, size = 0x4, offset = 0x4, fixed_abs, tag = 'smem constant byte address 0x4 - core index']
  #allocation1 [shape = 'u32[144,128]{1,0:T(1,128)}', space=vmem, size = 0x12000, scoped, tag = 'internal scratch']
  #allocation2 [shape = 'f32[8,1]{1,0:T(8,128)}', space=vmem, size = 0x1000, scoped, tag = 'scratch operand']
  #allocation3 [shape = 'f32[8,1]{1,0:T(8,128)}', space=vmem, size = 0x1000, scoped, tag = 'scratch operand']
  #allocation4 [shape = 'f32[8,16]{1,0:T(8,128)}', space=vmem, size = 0x1000, scoped, tag = 'scratch operand']
  %s0 = inlined_call_operand.vmem [shape: bf16[4,8,16], index: 0, kind: input, shape index: {}]
  %s1 = inlined_call_operand.vmem [shape: bf16[4,8,16], index: 1, kind: input, shape index: {}]
  %s2 = inlined_call_operand.vmem [shape: bf16[4,8,16], index: 2, kind: input, shape index: {}]
  %s3 = inlined_call_operand.vmem [shape: bf16[4,8,16], index: 3, kind: output, shape index: {}]
  %s4 = sld [smem:[#allocation0]]
  $region61: #{gpt_forward.18} parent=0
    _
  %s6 = ssub.s32 1, %s4
  %s7 = scalar_select 0, %s6, %s4
  loop: start=0, step=1, limit=6
  $region2: #{gpt_forward.18} parent=0 // loop_pre_header
    _
  $region3: #{gpt_forward.18} parent=0 // loop_header
    %s9 = sphi 0, %s13
    %p10 = scmp.ge.s32.totalorder %s9, 6
    %s16 = sphi 0, %s35
    %s17 = sphi 0, %s31
    %s18 = sphi 0, %s27
    %s19 = sphi 0, %s16
    %s20 = sphi 0, %s17
    %s21 = sphi 0, %s18
    %s22 = sphi 0, %s19
    %s23 = sphi 0, %s20
    %s24 = sphi 0, %s21
    %s40 = sphi 0, %s42
    %s43 = sphi 0, %s40
    %s44 = sphi 0, %s43
    %s60 = sphi 0, %s44
    %s72 = sphi 0, %s74
    %s75 = sphi 0, %s72
    %s76 = sphi 0, %s75
    %s92 = sphi 0, %s76
    %s104 = sphi 0, %s106
    %s107 = sphi 0, %s104
    %s108 = sphi 0, %s107
    %s124 = sphi 0, %s108
    %s132 = sphi 0, %s134
    %s135 = sphi 0, %s132
    %s136 = sphi 0, %s135
    %s152 = sphi 0, %s136
  $region4: #{gpt_forward.18} parent=0 // loop_header_branch
    %12 = sbr.rel (%p10) target = $region8
  $region5: #{gpt_forward.18} parent=0 // loop_body
    %s14 = ssub.s32 %s9, 1
    %s15 = ssub.s32 %s9, 2
    %s25 = sadd.s32 1, %s18
    %p26 = scmp.ge.s32.totalorder %s25, 1
    %s27 = scalar_select %p26, 0, %s25
    %s28 = sadd.s32 1, %s17
    %s29 = scalar_select %p26, %s28, %s17
    %p30 = scmp.ge.s32.totalorder %s29, 1
    %s31 = scalar_select %p30, 0, %s29
    %s32 = sadd.s32 1, %s16
    %s33 = scalar_select %p30, %s32, %s16
    %p34 = scmp.ge.s32.totalorder %s33, 4
    %s35 = scalar_select %p34, 0, %s33
    %s36 = ssub.s32 %s16, %s35
    %s37 = ssub.s32 %s17, %s31
    %s38 = sor.u32 %s36, %s37
    %p39 = scmp.eq.s32.totalorder %s38, 0
    %s41 = sadd.s32 %s40, 1
    %s42 = scalar_select %p39, %s40, %s41
    %p45 = pneg %p39
    %p46 = scmp.eq.s32.totalorder %s9, 3
    %p47 = por %p45, %p46
    %p48 = scmp.ne.s32.totalorder %s40, %s43
    %p49 = scmp.eq.s32.totalorder %s9, 0
    %p50 = por %p48, %p49
    %p51 = scmp.ne.s32.totalorder %s40, %s43
    %p52 = scmp.eq.s32.totalorder %s14, 3
    %p53 = por %p51, %p52
    %p54 = scmp.ne.s32.totalorder %s43, %s44
    %p55 = scmp.eq.s32.totalorder %s14, 0
    %p56 = por %p54, %p55
    %p57 = scmp.ne.s32.totalorder %s43, %s44
    %p58 = scmp.eq.s32.totalorder %s15, 3
    %p59 = por %p57, %p58
    %p61 = scmp.ne.s32.totalorder %s44, %s60
    %p62 = scmp.eq.s32.totalorder %s15, 0
    %p63 = por %p61, %p62
    %p64 = scmp.lt.s32.totalorder %s17, %s18
    %s65 = scalar_select %p64, %s17, %s18
    %p66 = scmp.lt.s32.totalorder %s31, %s27
    %s67 = scalar_select %p66, %s31, %s27
    %s68 = ssub.s32 %s16, %s35
    %s69 = ssub.s32 %s65, %s67
    %s70 = sor.u32 %s68, %s69
    %p71 = scmp.eq.s32.totalorder %s70, 0
    %s73 = sadd.s32 %s72, 1
    %s74 = scalar_select %p71, %s72, %s73
    %p77 = pneg %p71
    %p78 = scmp.eq.s32.totalorder %s9, 3
    %p79 = por %p77, %p78
    %p80 = scmp.ne.s32.totalorder %s72, %s75
    %p81 = scmp.eq.s32.totalorder %s9, 0
    %p82 = por %p80, %p81
    %p83 = scmp.ne.s32.totalorder %s72, %s75
    %p84 = scmp.eq.s32.totalorder %s14, 3
    %p85 = por %p83, %p84
    %p86 = scmp.ne.s32.totalorder %s75, %s76
    %p87 = scmp.eq.s32.totalorder %s14, 0
    %p88 = por %p86, %p87
    %p89 = scmp.ne.s32.totalorder %s75, %s76
    %p90 = scmp.eq.s32.totalorder %s15, 3
    %p91 = por %p89, %p90
    %p93 = scmp.ne.s32.totalorder %s76, %s92
    %p94 = scmp.eq.s32.totalorder %s15, 0
    %p95 = por %p93, %p94
    %p96 = scmp.lt.s32.totalorder %s17, %s18
    %s97 = scalar_select %p96, %s17, %s18
    %p98 = scmp.lt.s32.totalorder %s31, %s27
    %s99 = scalar_select %p98, %s31, %s27
    %s100 = ssub.s32 %s16, %s35
    %s101 = ssub.s32 %s97, %s99
    %s102 = sor.u32 %s100, %s101
    %p103 = scmp.eq.s32.totalorder %s102, 0
    %s105 = sadd.s32 %s104, 1
    %s106 = scalar_select %p103, %s104, %s105
    %p109 = pneg %p103
    %p110 = scmp.eq.s32.totalorder %s9, 3
    %p111 = por %p109, %p110
    %p112 = scmp.ne.s32.totalorder %s104, %s107
    %p113 = scmp.eq.s32.totalorder %s9, 0
    %p114 = por %p112, %p113
    %p115 = scmp.ne.s32.totalorder %s104, %s107
    %p116 = scmp.eq.s32.totalorder %s14, 3
    %p117 = por %p115, %p116
    %p118 = scmp.ne.s32.totalorder %s107, %s108
    %p119 = scmp.eq.s32.totalorder %s14, 0
    %p120 = por %p118, %p119
    %p121 = scmp.ne.s32.totalorder %s107, %s108
    %p122 = scmp.eq.s32.totalorder %s15, 3
    %p123 = por %p121, %p122
    %p125 = scmp.ne.s32.totalorder %s108, %s124
    %p126 = scmp.eq.s32.totalorder %s15, 0
    %p127 = por %p125, %p126
    %s128 = ssub.s32 %s16, %s35
    %s129 = ssub.s32 %s17, %s31
    %s130 = sor.u32 %s128, %s129
    %p131 = scmp.eq.s32.totalorder %s130, 0
    %s133 = sadd.s32 %s132, 1
    %s134 = scalar_select %p131, %s132, %s133
    %p137 = pneg %p131
    %p138 = scmp.eq.s32.totalorder %s9, 3
    %p139 = por %p137, %p138
    %p140 = scmp.ne.s32.totalorder %s132, %s135
    %p141 = scmp.eq.s32.totalorder %s9, 0
    %p142 = por %p140, %p141
    %p143 = scmp.ne.s32.totalorder %s132, %s135
    %p144 = scmp.eq.s32.totalorder %s14, 3
    %p145 = por %p143, %p144
    %p146 = scmp.ne.s32.totalorder %s135, %s136
    %p147 = scmp.eq.s32.totalorder %s14, 0
    %p148 = por %p146, %p147
    %p149 = scmp.ne.s32.totalorder %s135, %s136
    %p150 = scmp.eq.s32.totalorder %s15, 3
    %p151 = por %p149, %p150
    %p153 = scmp.ne.s32.totalorder %s136, %s152
    %p154 = scmp.eq.s32.totalorder %s15, 0
    %p155 = por %p153, %p154
    %p156 = scmp.le.s32.totalorder 1, %s9
    %p157 = scmp.lt.s32.totalorder %s9, 5
    %p158 = pnand %p156, %p157
    %p159 = pneg %p158
    // Predicated region
    $region9: #{gpt_forward.18} parent=5 // pred_check
      _
    $region10: #{gpt_forward.18} parent=5 // pred_check_branch
      %161 = sbr.rel (%p158) target = $region12
    $region11: #{gpt_forward.18} parent=5 // pred_region
      %s162 = ssub.s32 %s9, 1
    $region12: #{gpt_forward.18} parent=5 // pred_fallthru
      _
    %p163 = scmp.lt.s32.totalorder %s9, 4
    // Predicated region
    $region13: #{gpt_forward.18} parent=5 // pred_check
      %p164 = pneg %p163
    $region14: #{gpt_forward.18} parent=5 // pred_check_branch
      %166 = sbr.rel (%p164) target = $region16
    $region15: #{gpt_forward.18} parent=5 // pred_region
      // Predicated region
      $region17: #{gpt_forward.18} parent=15 // pred_check
        %p167 = pneg %p50
      $region18: #{gpt_forward.18} parent=15 // pred_check_branch
        %169 = sbr.rel (%p167) target = $region20
      $region19: #{gpt_forward.18} parent=15 // pred_region
        %p170 = scmp.lt.s32.totalorder %s16, 3
        %s171 = scalar_select %p170, %s16, 3
        %p172 = scmp.lt.s32.totalorder %s17, 0
        %s173 = scalar_select %p172, %s17, 0
        %s174 = sadd.s32 %s173, %s171
        %s175 = smul.addr %s174, 4
        %s176 = scalar_lea.vmem %s0, %s175
      $region20: #{gpt_forward.18} parent=15 // pred_fallthru
        _
      // Predicated region
      $region21: #{gpt_forward.18} parent=15 // pred_check
        %p177 = pneg %p82
      $region22: #{gpt_forward.18} parent=15 // pred_check_branch
        %179 = sbr.rel (%p177) target = $region24
      $region23: #{gpt_forward.18} parent=15 // pred_region
        %p180 = scmp.lt.s32.totalorder %s17, %s18
        %s181 = scalar_select %p180, %s17, %s18
        %p182 = scmp.lt.s32.totalorder %s16, 3
        %s183 = scalar_select %p182, %s16, 3
        %p184 = scmp.lt.s32.totalorder %s181, 0
        %s185 = scalar_select %p184, %s181, 0
        %s186 = sadd.s32 %s185, %s183
        %s187 = smul.addr %s186, 4
        %s188 = scalar_lea.vmem %s1, %s187
        %p189 = scmp.lt.s32.totalorder %s17, %s18
        %s190 = scalar_select %p189, %s17, %s18
      $region24: #{gpt_forward.18} parent=15 // pred_fallthru
        _
      // Predicated region
      $region25: #{gpt_forward.18} parent=15 // pred_check
        %p191 = pneg %p114
      $region26: #{gpt_forward.18} parent=15 // pred_check_branch
        %193 = sbr.rel (%p191) target = $region28
      $region27: #{gpt_forward.18} parent=15 // pred_region
        %p194 = scmp.lt.s32.totalorder %s17, %s18
        %s195 = scalar_select %p194, %s17, %s18
        %p196 = scmp.lt.s32.totalorder %s16, 3
        %s197 = scalar_select %p196, %s16, 3
        %p198 = scmp.lt.s32.totalorder %s195, 0
        %s199 = scalar_select %p198, %s195, 0
        %s200 = sadd.s32 %s199, %s197
        %s201 = smul.addr %s200, 4
        %s202 = scalar_lea.vmem %s2, %s201
        %p203 = scmp.lt.s32.totalorder %s17, %s18
        %s204 = scalar_select %p203, %s17, %s18
      $region28: #{gpt_forward.18} parent=15 // pred_fallthru
        _
    $region16: #{gpt_forward.18} parent=5 // pred_fallthru
      _
    %p205 = scmp.le.s32.totalorder 1, %s9
    %p206 = scmp.lt.s32.totalorder %s9, 5
    %p207 = pnand %p205, %p206
    %p208 = pneg %p207
    // Predicated region
    $region29: #{gpt_forward.18} parent=5 // pred_check
      _
    $region30: #{gpt_forward.18} parent=5 // pred_check_branch
      %210 = sbr.rel (%p207) target = $region32
    $region31: #{gpt_forward.18} parent=5 // pred_region
      %s211 = ssub.s32 %s9, 1
      %p212 = scmp.lt.s32.totalorder %s19, 3
      %s213 = scalar_select %p212, %s19, 3
      %p214 = scmp.lt.s32.totalorder %s20, 0
      %s215 = scalar_select %p214, %s20, 0
      %s216 = sadd.s32 %s215, %s213
      %s217 = smul.addr %s216, 4
      %s218 = scalar_lea.vmem %s0, %s217
      %p219 = pneg %p56
      %p220 = pneg %p53
      %p221 = scmp.lt.s32.totalorder %s20, %s21
      %s222 = scalar_select %p221, %s20, %s21
      %p223 = scmp.lt.s32.totalorder %s19, 3
      %s224 = scalar_select %p223, %s19, 3
      %p225 = scmp.lt.s32.totalorder %s222, 0
      %s226 = scalar_select %p225, %s222, 0
      %s227 = sadd.s32 %s226, %s224
      %s228 = smul.addr %s227, 4
      %s229 = scalar_lea.vmem %s1, %s228
      %p230 = pneg %p88
      %p231 = pneg %p85
      %p232 = scmp.lt.s32.totalorder %s20, %s21
      %s233 = scalar_select %p232, %s20, %s21
      %p234 = scmp.lt.s32.totalorder %s19, 3
      %s235 = scalar_select %p234, %s19, 3
      %p236 = scmp.lt.s32.totalorder %s233, 0
      %s237 = scalar_select %p236, %s233, 0
      %s238 = sadd.s32 %s237, %s235
      %s239 = smul.addr %s238, 4
      %s240 = scalar_lea.vmem %s2, %s239
      %p241 = pneg %p120
      %p242 = pneg %p117
      %p243 = pneg %p148
      %p244 = pneg %p145
      %p245 = scmp.lt.s32.totalorder %s19, 3
      %s246 = scalar_select %p245, %s19, 3
      %p247 = scmp.lt.s32.totalorder %s20, 0
      %s248 = scalar_select %p247, %s20, 0
      %s249 = sadd.s32 %s248, %s246
      %s250 = smul.addr %s249, 4
      %s251 = scalar_lea.vmem %s3, %s250
      %p252 = scmp.lt.s32.totalorder %s19, 3
      %s253 = scalar_select %p252, %s19, 3
      %p254 = scmp.lt.s32.totalorder %s20, 0
      %s255 = scalar_select %p254, %s20, 0
      %s256 = sadd.s32 %s255, %s253
      %s257 = smul.addr %s256, 4
      %s258 = scalar_lea.vmem %s0, %s257
      %p259 = scmp.lt.s32.totalorder %s20, %s21
      %s260 = scalar_select %p259, %s20, %s21
      %p261 = scmp.lt.s32.totalorder %s19, 3
      %s262 = scalar_select %p261, %s19, 3
      %p263 = scmp.lt.s32.totalorder %s260, 0
      %s264 = scalar_select %p263, %s260, 0
      %s265 = sadd.s32 %s264, %s262
      %s266 = smul.addr %s265, 4
      %s267 = scalar_lea.vmem %s1, %s266
      %p268 = scmp.lt.s32.totalorder %s20, %s21
      %s269 = scalar_select %p268, %s20, %s21
      %p270 = scmp.lt.s32.totalorder %s20, %s21
      %s271 = scalar_select %p270, %s20, %s21
      %p272 = scmp.lt.s32.totalorder %s19, 3
      %s273 = scalar_select %p272, %s19, 3
      %p274 = scmp.lt.s32.totalorder %s271, 0
      %s275 = scalar_select %p274, %s271, 0
      %s276 = sadd.s32 %s275, %s273
      %s277 = smul.addr %s276, 4
      %s278 = scalar_lea.vmem %s2, %s277
      %p279 = scmp.lt.s32.totalorder %s20, %s21
      %s280 = scalar_select %p279, %s20, %s21
      %p281 = scmp.lt.s32.totalorder %s19, 3
      %s282 = scalar_select %p281, %s19, 3
      %p283 = scmp.lt.s32.totalorder %s20, 0
      %s284 = scalar_select %p283, %s20, 0
      %s285 = sadd.s32 %s284, %s282
      %s286 = smul.addr %s285, 4
      %s287 = scalar_lea.vmem %s3, %s286
      %s289 = smul.u32 %s20, 8
      %s290 = smul.u32 %s21, 8
      %p291 = scmp.eq.s32.totalorder %s21, 0
      // Predicated region
      $region33: #{gpt_forward.18} parent=31 // pred_check
        %p292 = pneg %p291
      $region34: #{gpt_forward.18} parent=31 // pred_check_branch
        %294 = sbr.rel (%p292) target = $region36
      $region35: #{gpt_forward.18} parent=31 // pred_region
        %vm295 = vcmask 7168
        %296 = vst.msk [vmem:[#allocation2] sm:$0xff] %vm295, -inf
        %297 = vst.msk [vmem:[#allocation3] sm:$0xff] %vm295, 0.0
        %vm298 = vcmask 130048
        %299 = vst.msk [vmem:[#allocation4] sm:$0xff] %vm298, 0.0
      $region36: #{gpt_forward.18} parent=31 // pred_fallthru
        _
      %v300 = vld [vmem:[%s258] sm:$0xf]
      %v301 = vld [vmem:[%s267] sm:$0xf]
      %v302 = vld [vmem:[%s278] sm:$0xf]
      %s303 = sadd.s32 %s290, 8
      %s304 = sadd.s32 %s289, 1
      %p305 = scmp.le.s32.totalorder %s303, %s304
      %s306 = sadd.s32 %s289, 8
      %p307 = scmp.lt.s32.totalorder %s290, %s306
      %p308 = scmp.gt.s32.totalorder %s303, %s304
      %p309 = pnand %p307, %p308
      %p310 = pneg %p309
      // Predicated region
      $region37: #{gpt_forward.18} parent=31 // pred_check
        %p311 = pneg %p305
      $region38: #{gpt_forward.18} parent=31 // pred_check_branch
        %313 = sbr.rel (%p311) target = $region40
      $region39: #{gpt_forward.18} parent=31 // pred_region
        %vm314 = vcmask 130048
        %v316 = vsel %vm314, %v300, 0
        %v319 = vsel %vm314, %v301, 0
        %321 = vmatprep.subr.bf16.mxu0 0
        %322 = vmatpush1.bf16.xpose.msra.mxu0 0
        %323 = vmatprep.subr.bf16.mxu0 0
        %324 = vmatpush1.bf16.xpose.msra.mxu0 0
        %325 = vmatprep.subr.bf16.mxu0 0
        %326 = vmatpush1.bf16.xpose.msra.mxu0 0
        %327 = vmatprep.subr.bf16.mxu0 0
        %328 = vmatpush1.bf16.xpose.msra.mxu0 0
        %329 = vmatprep.subr.bf16.mxu0 0
        %330 = vmatpush1.bf16.xpose.msra.mxu0 0
        %331 = vmatprep.subr.bf16.mxu0 0
        %332 = vmatpush1.bf16.xpose.msra.mxu0 0
        %333 = vmatprep.subr.bf16.mxu0 0
        %334 = vmatpush1.bf16.xpose.msra.mxu0 0
        %335 = vmatprep.subr.bf16.mxu0 0
        %336 = vmatpush1.bf16.xpose.msra.mxu0 %v319
        %337 = vmatprep.subr.bf16.mxu0 0
        %338 = vmatpush2.bf16.xpose.msra.mxu0 0
        %339 = vmatprep.subr.bf16.mxu0 0
        %340 = vmatpush2.bf16.xpose.msra.mxu0 0
        %341 = vmatprep.subr.bf16.mxu0 0
        %342 = vmatpush2.bf16.xpose.msra.mxu0 0
        %343 = vmatprep.subr.bf16.mxu0 0
        %344 = vmatpush2.bf16.xpose.msra.mxu0 0
        %345 = vmatprep.subr.bf16.mxu0 0
        %346 = vmatpush2.bf16.xpose.msra.mxu0 0
        %347 = vmatprep.subr.bf16.mxu0 0
        %348 = vmatpush2.bf16.xpose.msra.mxu0 0
        %349 = vmatprep.subr.bf16.mxu0 0
        %350 = vmatpush2.bf16.xpose.msra.mxu0 0
        %351 = vmatprep.subr.bf16.mxu0 0
        %352 = vmatpush2.bf16.xpose.msra.mxu0 0
        %353 = vmatprep.mubr.bf16.mxu0 0
        %354 = vmatmul.mubr.bf16.gmra.mxu0 %v316
        %v355 = vpop.f32.mrf.mxu0
        %v356 = vadd.f32 0.0, %v355
        %v357 = vpop.f32.mrf.mxu0
        %v358 = vpop.f32.mrf.mxu0
        %v359 = vpop.f32.mrf.mxu0
        %360 = vdwg.mxu0
        %v361 = vmul.f32 %v356, 0.25
        %v362 = vld [vmem:[#allocation2] sm:$0xff]
        %vm363 = vcmask 64512
        %v364 = vsel %vm363, %v361, -inf
        %365 = vmax.xlane.f32.xlu0 %v364
        %v366 = vpop.xlane.xlu0 %365
        %v367 = vmax.f32 %v362, %v366
        %v368 = vsub.f32 %v362, %v367
        %v369 = vmul.f32 %v368, 1.442695
        %v370 = vpow.pop %v369
        %372 = vset.pattern.permute.xlu0 0
        %373 = vperm.xlu0 %372, %v367
        %v374 = vpop.permute.xlu0 %373
        %v376 = vsub.f32 %v361, %v374
        %v377 = vmul.f32 %v376, 1.442695
        %v378 = vpow.pop %v377
        %v379 = vld [vmem:[#allocation3] sm:$0xff]
        %v380 = vmul.f32 %v370, %v379
        %v381 = vsel %vm363, %v378, 0.0
        %382 = vadd.xlane.f32.xlu0 %v381
        %v383 = vpop.xlane.xlu0 %382
        %v384 = vadd.f32 %v380, %v383
        %vm385 = vcmask 7168
        %386 = vst.msk [vmem:[#allocation3] sm:$0xff] %vm385, %v384
        %v387 = vld [vmem:[#allocation4] sm:$0xff]
        %389 = vset.pattern.permute.xlu0 0
        %390 = vperm.xlu0 %389, %v370
        %v391 = vpop.permute.xlu0 %390
        %v393 = vmul.f32 %v391, %v387
        %v394 = vpack.c.bf16 %v378, %v378
        %v396 = vsel %vm363, %v394, 0
        %vm398 = vcmask 1043456
        %v400 = vsel %vm398, %v302, 0
        %402 = vmatprep.subr.bf16.mxu0 0
        %403 = vmatpush1.bf16.msra.mxu0 0
        %404 = vmatprep.subr.bf16.mxu0 0
        %405 = vmatpush1.bf16.msra.mxu0 0
        %406 = vmatprep.subr.bf16.mxu0 0
        %407 = vmatpush1.bf16.msra.mxu0 0
        %408 = vmatprep.subr.bf16.mxu0 0
        %409 = vmatpush1.bf16.msra.mxu0 0
        %410 = vmatprep.subr.bf16.mxu0 0
        %411 = vmatpush1.bf16.msra.mxu0 0
        %412 = vmatprep.subr.bf16.mxu0 0
        %413 = vmatpush1.bf16.msra.mxu0 0
        %414 = vmatprep.subr.bf16.mxu0 0
        %415 = vmatpush1.bf16.msra.mxu0 0
        %416 = vmatprep.subr.bf16.mxu0 0
        %417 = vmatpush1.bf16.msra.mxu0 %v400
        %418 = vmatprep.subr.bf16.mxu0 0
        %419 = vmatpush2.bf16.msra.mxu0 0
        %420 = vmatprep.subr.bf16.mxu0 0
        %421 = vmatpush2.bf16.msra.mxu0 0
        %422 = vmatprep.subr.bf16.mxu0 0
        %423 = vmatpush2.bf16.msra.mxu0 0
        %424 = vmatprep.subr.bf16.mxu0 0
        %425 = vmatpush2.bf16.msra.mxu0 0
        %426 = vmatprep.subr.bf16.mxu0 0
        %427 = vmatpush2.bf16.msra.mxu0 0
        %428 = vmatprep.subr.bf16.mxu0 0
        %429 = vmatpush2.bf16.msra.mxu0 0
        %430 = vmatprep.subr.bf16.mxu0 0
        %431 = vmatpush2.bf16.msra.mxu0 0
        %432 = vmatprep.subr.bf16.mxu0 0
        %433 = vmatpush2.bf16.msra.mxu0 0
        %434 = vmatprep.mubr.bf16.mxu0 0
        %435 = vmatmul.mubr.bf16.gmra.mxu0 %v396
        %v436 = vpop.f32.mrf.mxu0
        %v437 = vadd.f32 0.0, %v436
        %v438 = vpop.f32.mrf.mxu0
        %v439 = vpop.f32.mrf.mxu0
        %v440 = vpop.f32.mrf.mxu0
        %441 = vdwg.mxu0
        %v442 = vadd.f32 %v393, %v437
        %443 = vst.msk [vmem:[#allocation4] sm:$0xff] %vm314, %v442
        %444 = vst.msk [vmem:[#allocation2] sm:$0xff] %vm385, %v367
      $region40: #{gpt_forward.18} parent=31 // pred_fallthru
        _
      // Predicated region
      $region41: #{gpt_forward.18} parent=31 // pred_check
        _
      $region42: #{gpt_forward.18} parent=31 // pred_check_branch
        %446 = sbr.rel (%p309) target = $region44
      $region43: #{gpt_forward.18} parent=31 // pred_region
        %v447 = vlaneseq
        %v448 = vshrl.u32 %v447, 7
        %v449 = vstv %s289
        %v450 = vadd.s32 %v449, %v448
        %v451 = vlaneseq
        %v452 = vand.u32 %v451, 127
        %v453 = vstv %s290
        %v454 = vadd.s32 %v453, %v452
        %vm455 = vcmp.le.s32.totalorder %v454, %v450
        %vm456 = vcmask 130048
        %v458 = vsel %vm456, %v300, 0
        %v461 = vsel %vm456, %v301, 0
        %463 = vmatprep.subr.bf16.mxu0 0
        %464 = vmatpush1.bf16.xpose.msra.mxu0 0
        %465 = vmatprep.subr.bf16.mxu0 0
        %466 = vmatpush1.bf16.xpose.msra.mxu0 0
        %467 = vmatprep.subr.bf16.mxu0 0
        %468 = vmatpush1.bf16.xpose.msra.mxu0 0
        %469 = vmatprep.subr.bf16.mxu0 0
        %470 = vmatpush1.bf16.xpose.msra.mxu0 0
        %471 = vmatprep.subr.bf16.mxu0 0
        %472 = vmatpush1.bf16.xpose.msra.mxu0 0
        %473 = vmatprep.subr.bf16.mxu0 0
        %474 = vmatpush1.bf16.xpose.msra.mxu0 0
        %475 = vmatprep.subr.bf16.mxu0 0
        %476 = vmatpush1.bf16.xpose.msra.mxu0 0
        %477 = vmatprep.subr.bf16.mxu0 0
        %478 = vmatpush1.bf16.xpose.msra.mxu0 %v461
        %479 = vmatprep.subr.bf16.mxu0 0
        %480 = vmatpush2.bf16.xpose.msra.mxu0 0
        %481 = vmatprep.subr.bf16.mxu0 0
        %482 = vmatpush2.bf16.xpose.msra.mxu0 0
        %483 = vmatprep.subr.bf16.mxu0 0
        %484 = vmatpush2.bf16.xpose.msra.mxu0 0
        %485 = vmatprep.subr.bf16.mxu0 0
        %486 = vmatpush2.bf16.xpose.msra.mxu0 0
        %487 = vmatprep.subr.bf16.mxu0 0
        %488 = vmatpush2.bf16.xpose.msra.mxu0 0
        %489 = vmatprep.subr.bf16.mxu0 0
        %490 = vmatpush2.bf16.xpose.msra.mxu0 0
        %491 = vmatprep.subr.bf16.mxu0 0
        %492 = vmatpush2.bf16.xpose.msra.mxu0 0
        %493 = vmatprep.subr.bf16.mxu0 0
        %494 = vmatpush2.bf16.xpose.msra.mxu0 0
        %495 = vmatprep.mubr.bf16.mxu0 0
        %496 = vmatmul.mubr.bf16.gmra.mxu0 %v458
        %v497 = vpop.f32.mrf.mxu0
        %v498 = vadd.f32 0.0, %v497
        %v499 = vpop.f32.mrf.mxu0
        %v500 = vpop.f32.mrf.mxu0
        %v501 = vpop.f32.mrf.mxu0
        %502 = vdwg.mxu0
        %v503 = vmul.f32 %v498, 0.25
        %v504 = vsel %vm455, %v503, -1e+30
        %v505 = vld [vmem:[#allocation2] sm:$0xff]
        %vm506 = vcmask 64512
        %v507 = vsel %vm506, %v504, -inf
        %508 = vmax.xlane.f32.xlu0 %v507
        %v509 = vpop.xlane.xlu0 %508
        %v510 = vmax.f32 %v505, %v509
        %v511 = vsub.f32 %v505, %v510
        %v512 = vmul.f32 %v511, 1.442695
        %v513 = vpow.pop %v512
        %515 = vset.pattern.permute.xlu0 0
        %516 = vperm.xlu0 %515, %v510
        %v517 = vpop.permute.xlu0 %516
        %v519 = vsub.f32 %v504, %v517
        %v520 = vmul.f32 %v519, 1.442695
        %v521 = vpow.pop %v520
        %v522 = vld [vmem:[#allocation3] sm:$0xff]
        %v523 = vmul.f32 %v513, %v522
        %v524 = vsel %vm506, %v521, 0.0
        %525 = vadd.xlane.f32.xlu0 %v524
        %v526 = vpop.xlane.xlu0 %525
        %v527 = vadd.f32 %v523, %v526
        %vm528 = vcmask 7168
        %529 = vst.msk [vmem:[#allocation3] sm:$0xff] %vm528, %v527
        %v530 = vld [vmem:[#allocation4] sm:$0xff]
        %532 = vset.pattern.permute.xlu0 0
        %533 = vperm.xlu0 %532, %v513
        %v534 = vpop.permute.xlu0 %533
        %v536 = vmul.f32 %v534, %v530
        %v537 = vpack.c.bf16 %v521, %v521
        %v539 = vsel %vm506, %v537, 0
        %vm541 = vcmask 1043456
        %v543 = vsel %vm541, %v302, 0
        %545 = vmatprep.subr.bf16.mxu0 0
        %546 = vmatpush1.bf16.msra.mxu0 0
        %547 = vmatprep.subr.bf16.mxu0 0
        %548 = vmatpush1.bf16.msra.mxu0 0
        %549 = vmatprep.subr.bf16.mxu0 0
        %550 = vmatpush1.bf16.msra.mxu0 0
        %551 = vmatprep.subr.bf16.mxu0 0
        %552 = vmatpush1.bf16.msra.mxu0 0
        %553 = vmatprep.subr.bf16.mxu0 0
        %554 = vmatpush1.bf16.msra.mxu0 0
        %555 = vmatprep.subr.bf16.mxu0 0
        %556 = vmatpush1.bf16.msra.mxu0 0
        %557 = vmatprep.subr.bf16.mxu0 0
        %558 = vmatpush1.bf16.msra.mxu0 0
        %559 = vmatprep.subr.bf16.mxu0 0
        %560 = vmatpush1.bf16.msra.mxu0 %v543
        %561 = vmatprep.subr.bf16.mxu0 0
        %562 = vmatpush2.bf16.msra.mxu0 0
        %563 = vmatprep.subr.bf16.mxu0 0
        %564 = vmatpush2.bf16.msra.mxu0 0
        %565 = vmatprep.subr.bf16.mxu0 0
        %566 = vmatpush2.bf16.msra.mxu0 0
        %567 = vmatprep.subr.bf16.mxu0 0
        %568 = vmatpush2.bf16.msra.mxu0 0
        %569 = vmatprep.subr.bf16.mxu0 0
        %570 = vmatpush2.bf16.msra.mxu0 0
        %571 = vmatprep.subr.bf16.mxu0 0
        %572 = vmatpush2.bf16.msra.mxu0 0
        %573 = vmatprep.subr.bf16.mxu0 0
        %574 = vmatpush2.bf16.msra.mxu0 0
        %575 = vmatprep.subr.bf16.mxu0 0
        %576 = vmatpush2.bf16.msra.mxu0 0
        %577 = vmatprep.mubr.bf16.mxu0 0
        %578 = vmatmul.mubr.bf16.gmra.mxu0 %v539
        %v579 = vpop.f32.mrf.mxu0
        %v580 = vadd.f32 0.0, %v579
        %v581 = vpop.f32.mrf.mxu0
        %v582 = vpop.f32.mrf.mxu0
        %v583 = vpop.f32.mrf.mxu0
        %584 = vdwg.mxu0
        %v585 = vadd.f32 %v536, %v580
        %586 = vst.msk [vmem:[#allocation4] sm:$0xff] %vm456, %v585
        %587 = vst.msk [vmem:[#allocation2] sm:$0xff] %vm528, %v510
      $region44: #{gpt_forward.18} parent=31 // pred_fallthru
        _
      // Predicated region
      $region45: #{gpt_forward.18} parent=31 // pred_check
        %p588 = pneg %p291
      $region46: #{gpt_forward.18} parent=31 // pred_check_branch
        %590 = sbr.rel (%p588) target = $region48
      $region47: #{gpt_forward.18} parent=31 // pred_region
        %v591 = vld [vmem:[#allocation4] sm:$0xff]
        %v592 = vld [vmem:[#allocation3] sm:$0xff]
        %594 = vset.pattern.permute.xlu0 0
        %595 = vperm.xlu0 %594, %v592
        %v596 = vpop.permute.xlu0 %595
        %v598 = vrcp.pop %v596
        %v599 = vmul.f32 %v591, %v598
        %v600 = vpack.c.bf16 %v599, %v599
        %vm601 = vcmask 125952
        %602 = vst.msk [vmem:[%s287] sm:$0xf] %vm601, %v600
      $region48: #{gpt_forward.18} parent=31 // pred_fallthru
        _
      %p603 = scmp.lt.s32.totalorder %s19, 3
      %s604 = scalar_select %p603, %s19, 3
      %p605 = scmp.lt.s32.totalorder %s20, 0
      %s606 = scalar_select %p605, %s20, 0
      %s607 = sadd.s32 %s606, %s604
      %s608 = smul.addr %s607, 4
      %s609 = scalar_lea.vmem %s3, %s608
      // Predicated region
      $region49: #{gpt_forward.18} parent=31 // pred_check
        %p610 = pneg %p145
      $region50: #{gpt_forward.18} parent=31 // pred_check_branch
        %612 = sbr.rel (%p610) target = $region52
      $region51: #{gpt_forward.18} parent=31 // pred_region
        _
      $region52: #{gpt_forward.18} parent=31 // pred_fallthru
        _
    $region32: #{gpt_forward.18} parent=5 // pred_fallthru
      _
    %p613 = scmp.le.s32.totalorder 2, %s9
    // Predicated region
    $region53: #{gpt_forward.18} parent=5 // pred_check
      %p614 = pneg %p613
    $region54: #{gpt_forward.18} parent=5 // pred_check_branch
      %616 = sbr.rel (%p614) target = $region56
    $region55: #{gpt_forward.18} parent=5 // pred_region
      %s617 = ssub.s32 %s9, 2
      // Predicated region
      $region57: #{gpt_forward.18} parent=55 // pred_check
        %p618 = pneg %p151
      $region58: #{gpt_forward.18} parent=55 // pred_check_branch
        %620 = sbr.rel (%p618) target = $region60
      $region59: #{gpt_forward.18} parent=55 // pred_region
        %p621 = scmp.lt.s32.totalorder %s22, 3
        %s622 = scalar_select %p621, %s22, 3
        %p623 = scmp.lt.s32.totalorder %s23, 0
        %s624 = scalar_select %p623, %s23, 0
        %s625 = sadd.s32 %s624, %s622
        %s626 = smul.addr %s625, 4
        %s627 = scalar_lea.vmem %s3, %s626
      $region60: #{gpt_forward.18} parent=55 // pred_fallthru
        _
    $region56: #{gpt_forward.18} parent=5 // pred_fallthru
      _
  $region6: #{gpt_forward.18} parent=0 // loop_footer
    %s13 = sadd.s32 1, %s9
  $region7: #{gpt_forward.18} parent=0 // loop_footer_branch
    %8 = sbr.rel target = $region3
  $region8: #{gpt_forward.18} parent=0 // loop_exit
    _

// kernel: gpt_forward.19
$region0: #{gpt_forward.19}
  #allocation0 [shape = 'u32[]', space=smem, size = 0x4, offset = 0x4, fixed_abs, tag = 'smem constant byte address 0x4 - core index']
  #allocation1 [shape = 'u32[144,128]{1,0:T(1,128)}', space=vmem, size = 0x12000, scoped, tag = 'internal scratch']
  %s0 = inlined_call_operand.vmem [shape: bf16[16,32], index: 0, kind: input, shape index: {}]
  %s1 = inlined_call_operand.vmem [shape: bf16[32,32], index: 1, kind: input, shape index: {}]
  %s2 = inlined_call_operand.vmem [shape: f32[1,32], index: 2, kind: input, shape index: {}]
  %s3 = inlined_call_operand.vmem [shape: f32[16,32], index: 3, kind: input, shape index: {}]
  %s4 = inlined_call_operand.vmem [shape: f32[16,32], index: 4, kind: output, shape index: {}]
  %s5 = sld [smem:[#allocation0]]
  $region26: #{gpt_forward.19} parent=0
    _
  %s7 = ssub.s32 1, %s5
  %s8 = scalar_select 0, %s7, %s5
  // Predicated region
  $region2: #{gpt_forward.19} parent=0 // pred_check
    _
  $region3: #{gpt_forward.19} parent=0 // pred_check_branch
    %10 = sbr.rel (0) target = $region5
  $region4: #{gpt_forward.19} parent=0 // pred_region
    _
  $region5: #{gpt_forward.19} parent=0 // pred_fallthru
    _
  // Predicated region
  $region6: #{gpt_forward.19} parent=0 // pred_check
    _
  $region7: #{gpt_forward.19} parent=0 // pred_check_branch
    %12 = sbr.rel (0) target = $region9
  $region8: #{gpt_forward.19} parent=0 // pred_region
    _
  $region9: #{gpt_forward.19} parent=0 // pred_fallthru
    _
  // Predicated region
  $region10: #{gpt_forward.19} parent=0 // pred_check
    _
  $region11: #{gpt_forward.19} parent=0 // pred_check_branch
    %14 = sbr.rel (0) target = $region13
  $region12: #{gpt_forward.19} parent=0 // pred_region
    _
  $region13: #{gpt_forward.19} parent=0 // pred_fallthru
    _
  // Predicated region
  $region14: #{gpt_forward.19} parent=0 // pred_check
    _
  $region15: #{gpt_forward.19} parent=0 // pred_check_branch
    %16 = sbr.rel (0) target = $region17
  $region16: #{gpt_forward.19} parent=0 // pred_region
    _
  $region17: #{gpt_forward.19} parent=0 // pred_fallthru
    _
  %v18 = vld [vmem:[%s0] sm:$0xf]
  %v19 = vld [vmem:[%s0 + $0x4] sm:$0xf]
  %v20 = vld [vmem:[%s1] sm:$0xf]
  %v21 = vld [vmem:[%s1 + $0x4] sm:$0xf]
  %v22 = vld [vmem:[%s1 + $0x8] sm:$0xf]
  %v23 = vld [vmem:[%s1 + $0xc] sm:$0xf]
  %v24 = vld [vmem:[%s2] sm:$0x1]
  %v26 = vlaneseq
  %v27 = vshrl.u32 %v26, 7
  %v28 = vsub.s32 0, %v27
  %v29 = vrot.slane %v24, %v28
  %v33 = vunpack.c.l.b16 %v18
  %v34 = vunpack.c.l.b16 %v19
  %v35 = vpack.c.b16 %v34, %v33
  %v40 = vunpack.c.l.b16 %v20
  %v41 = vunpack.c.l.b16 %v21
  %v42 = vunpack.c.l.b16 %v22
  %v43 = vunpack.c.l.b16 %v23
  %v44 = vpack.c.b16 %v41, %v40
  %v45 = vpack.c.b16 %v43, %v42
  %vm48 = vcmask 261120
  %v50 = vsel %vm48, %v35, 0
  %52 = vmatprep.subr.bf16.mxu0 0
  %53 = vmatpush1.bf16.msra.mxu0 0
  %54 = vmatprep.subr.bf16.mxu0 0
  %55 = vmatpush1.bf16.msra.mxu0 0
  %56 = vmatprep.subr.bf16.mxu0 0
  %57 = vmatpush1.bf16.msra.mxu0 0
  %58 = vmatprep.subr.bf16.mxu0 0
  %59 = vmatpush1.bf16.msra.mxu0 0
  %60 = vmatprep.subr.bf16.mxu0 0
  %61 = vmatpush1.bf16.msra.mxu0 0
  %62 = vmatprep.subr.bf16.mxu0 0
  %63 = vmatpush1.bf16.msra.mxu0 0
  %64 = vmatprep.subr.bf16.mxu0 0
  %65 = vmatpush1.bf16.msra.mxu0 %v45
  %66 = vmatprep.subr.bf16.mxu0 0
  %67 = vmatpush1.bf16.msra.mxu0 %v44
  %68 = vmatprep.subr.bf16.mxu0 0
  %69 = vmatpush2.bf16.msra.mxu0 0
  %70 = vmatprep.subr.bf16.mxu0 0
  %71 = vmatpush2.bf16.msra.mxu0 0
  %72 = vmatprep.subr.bf16.mxu0 0
  %73 = vmatpush2.bf16.msra.mxu0 0
  %74 = vmatprep.subr.bf16.mxu0 0
  %75 = vmatpush2.bf16.msra.mxu0 0
  %76 = vmatprep.subr.bf16.mxu0 0
  %77 = vmatpush2.bf16.msra.mxu0 0
  %78 = vmatprep.subr.bf16.mxu0 0
  %79 = vmatpush2.bf16.msra.mxu0 0
  %80 = vmatprep.subr.bf16.mxu0 0
  %81 = vmatpush2.bf16.msra.mxu0 0
  %82 = vmatprep.subr.bf16.mxu0 0
  %83 = vmatpush2.bf16.msra.mxu0 0
  %84 = vmatprep.mubr.bf16.mxu0 0
  %85 = vmatmul.mubr.bf16.gmra.mxu0 %v50
  %v86 = vpop.f32.mrf.mxu0
  %v87 = vadd.f32 %v29, %v86
  %v88 = vpop.f32.mrf.mxu0
  %v89 = vpop.f32.mrf.mxu0
  %v90 = vadd.f32 %v29, %v89
  %v91 = vpop.f32.mrf.mxu0
  %92 = vdwg.mxu0
  %v93 = vld [vmem:[%s3] sm:$0xff]
  %v94 = vld [vmem:[%s3 + $0x8] sm:$0xff]
  %v95 = vadd.f32 %v87, %v93
  %v96 = vadd.f32 %v90, %v94
  %97 = vst.msk [vmem:[%s4] sm:$0xff] %vm48, %v95
  %98 = vst.msk [vmem:[%s4 + $0x8] sm:$0xff] %vm48, %v96
  // Predicated region
  $region18: #{gpt_forward.19} parent=0 // pred_check
    _
  $region19: #{gpt_forward.19} parent=0 // pred_check_branch
    %100 = sbr.rel (0) target = $region21
  $region20: #{gpt_forward.19} parent=0 // pred_region
    _
  $region21: #{gpt_forward.19} parent=0 // pred_fallthru
    _
  // Predicated region
  $region22: #{gpt_forward.19} parent=0 // pred_check
    _
  $region23: #{gpt_forward.19} parent=0 // pred_check_branch
    %102 = sbr.rel (0) target = $region25
  $region24: #{gpt_forward.19} parent=0 // pred_region
    _
  $region25: #{gpt_forward.19} parent=0 // pred_fallthru
    _

// kernel: gpt_forward.21
$region0: #{gpt_forward.21}
  #allocation0 [shape = 'u32[]', space=smem, size = 0x4, offset = 0x4, fixed_abs, tag = 'smem constant byte address 0x4 - core index']
  #allocation1 [shape = 'u32[144,128]{1,0:T(1,128)}', space=vmem, size = 0x12000, scoped, tag = 'internal scratch']
  %s0 = inlined_call_operand.vmem [shape: bf16[16,32], index: 0, kind: input, shape index: {}]
  %s1 = inlined_call_operand.vmem [shape: bf16[32,128], index: 1, kind: input, shape index: {}]
  %s2 = inlined_call_operand.vmem [shape: f32[1,128], index: 2, kind: input, shape index: {}]
  %s3 = inlined_call_operand.vmem [shape: bf16[16,128], index: 3, kind: output, shape index: {}]
  %s4 = sld [smem:[#allocation0]]
  $region22: #{gpt_forward.21} parent=0
    _
  %s6 = ssub.s32 1, %s4
  %s7 = scalar_select 0, %s6, %s4
  // Predicated region
  $region2: #{gpt_forward.21} parent=0 // pred_check
    _
  $region3: #{gpt_forward.21} parent=0 // pred_check_branch
    %9 = sbr.rel (0) target = $region5
  $region4: #{gpt_forward.21} parent=0 // pred_region
    _
  $region5: #{gpt_forward.21} parent=0 // pred_fallthru
    _
  // Predicated region
  $region6: #{gpt_forward.21} parent=0 // pred_check
    _
  $region7: #{gpt_forward.21} parent=0 // pred_check_branch
    %11 = sbr.rel (0) target = $region9
  $region8: #{gpt_forward.21} parent=0 // pred_region
    _
  $region9: #{gpt_forward.21} parent=0 // pred_fallthru
    _
  // Predicated region
  $region10: #{gpt_forward.21} parent=0 // pred_check
    _
  $region11: #{gpt_forward.21} parent=0 // pred_check_branch
    %13 = sbr.rel (0) target = $region13
  $region12: #{gpt_forward.21} parent=0 // pred_region
    _
  $region13: #{gpt_forward.21} parent=0 // pred_fallthru
    _
  %v15 = vld [vmem:[%s0] sm:$0xf]
  %v16 = vld [vmem:[%s0 + $0x4] sm:$0xf]
  %v17 = vld [vmem:[%s1] sm:$0xf]
  %v18 = vld [vmem:[%s1 + $0x4] sm:$0xf]
  %v19 = vld [vmem:[%s1 + $0x8] sm:$0xf]
  %v20 = vld [vmem:[%s1 + $0xc] sm:$0xf]
  %v21 = vld [vmem:[%s2] sm:$0x1]
  %v23 = vlaneseq
  %v24 = vshrl.u32 %v23, 7
  %v25 = vsub.s32 0, %v24
  %v26 = vrot.slane %v21, %v25
  %v30 = vunpack.c.l.b16 %v15
  %v31 = vunpack.c.l.b16 %v16
  %v32 = vpack.c.b16 %v31, %v30
  %v37 = vunpack.c.l.b16 %v17
  %v38 = vunpack.c.l.b16 %v18
  %v39 = vunpack.c.l.b16 %v19
  %v40 = vunpack.c.l.b16 %v20
  %v41 = vpack.c.b16 %v38, %v37
  %v42 = vpack.c.b16 %v40, %v39
  %vm45 = vcmask 261120
  %v47 = vsel %vm45, %v32, 0
  %49 = vmatprep.subr.bf16.mxu0 0
  %50 = vmatpush1.bf16.msra.mxu0 0
  %51 = vmatprep.subr.bf16.mxu0 0
  %52 = vmatpush1.bf16.msra.mxu0 0
  %53 = vmatprep.subr.bf16.mxu0 0
  %54 = vmatpush1.bf16.msra.mxu0 0
  %55 = vmatprep.subr.bf16.mxu0 0
  %56 = vmatpush1.bf16.msra.mxu0 0
  %57 = vmatprep.subr.bf16.mxu0 0
  %58 = vmatpush1.bf16.msra.mxu0 0
  %59 = vmatprep.subr.bf16.mxu0 0
  %60 = vmatpush1.bf16.msra.mxu0 0
  %61 = vmatprep.subr.bf16.mxu0 0
  %62 = vmatpush1.bf16.msra.mxu0 %v42
  %63 = vmatprep.subr.bf16.mxu0 0
  %64 = vmatpush1.bf16.msra.mxu0 %v41
  %65 = vmatprep.subr.bf16.mxu0 0
  %66 = vmatpush2.bf16.msra.mxu0 0
  %67 = vmatprep.subr.bf16.mxu0 0
  %68 = vmatpush2.bf16.msra.mxu0 0
  %69 = vmatprep.subr.bf16.mxu0 0
  %70 = vmatpush2.bf16.msra.mxu0 0
  %71 = vmatprep.subr.bf16.mxu0 0
  %72 = vmatpush2.bf16.msra.mxu0 0
  %73 = vmatprep.subr.bf16.mxu0 0
  %74 = vmatpush2.bf16.msra.mxu0 0
  %75 = vmatprep.subr.bf16.mxu0 0
  %76 = vmatpush2.bf16.msra.mxu0 0
  %77 = vmatprep.subr.bf16.mxu0 0
  %78 = vmatpush2.bf16.msra.mxu0 0
  %79 = vmatprep.subr.bf16.mxu0 0
  %80 = vmatpush2.bf16.msra.mxu0 0
  %81 = vmatprep.mubr.bf16.mxu0 0
  %82 = vmatmul.mubr.bf16.gmra.mxu0 %v47
  %v83 = vpop.f32.mrf.mxu0
  %v84 = vadd.f32 %v26, %v83
  %v85 = vpop.f32.mrf.mxu0
  %v86 = vpop.f32.mrf.mxu0
  %v87 = vadd.f32 %v26, %v86
  %v88 = vpop.f32.mrf.mxu0
  %89 = vdwg.mxu0
  %v90 = vmul.f32 %v84, 0.5
  %v91 = vmul.f32 %v87, 0.5
  %v92 = vmul.f32 %v84, 0.044715
  %v93 = vmul.f32 %v87, 0.044715
  %v94 = vmul.f32 %v92, %v84
  %v95 = vmul.f32 %v93, %v87
  %v96 = vmul.f32 %v94, %v84
  %v97 = vmul.f32 %v95, %v87
  %v98 = vadd.f32 %v84, %v96
  %v99 = vadd.f32 %v87, %v97
  %v100 = vmul.f32 %v98, 0.7978846
  %v101 = vmul.f32 %v99, 0.7978846
  %v102 = vtanh.pop %v100
  %v103 = vtanh.pop %v101
  %v104 = vadd.f32 %v102, 1.0
  %v105 = vadd.f32 %v103, 1.0
  %v106 = vmul.f32 %v90, %v104
  %v107 = vmul.f32 %v91, %v105
  %v108 = vpack.c.bf16 %v107, %v106
  %v110 = vunpack.c.l.b16 %v108
  %v111 = vunpack.c.h.b16 %v108
  %v112 = vpack.c.b16 %v110, %v110
  %v113 = vpack.c.b16 %v111, %v111
  %116 = vst [vmem:[%s3] sm:$0xf] %v112
  %117 = vst [vmem:[%s3 + $0x4] sm:$0xf] %v113
  // Predicated region
  $region14: #{gpt_forward.21} parent=0 // pred_check
    _
  $region15: #{gpt_forward.21} parent=0 // pred_check_branch
    %119 = sbr.rel (0) target = $region17
  $region16: #{gpt_forward.21} parent=0 // pred_region
    _
  $region17: #{gpt_forward.21} parent=0 // pred_fallthru
    _
  // Predicated region
  $region18: #{gpt_forward.21} parent=0 // pred_check
    _
  $region19: #{gpt_forward.21} parent=0 // pred_check_branch
    %121 = sbr.rel (0) target = $region21
  $region20: #{gpt_forward.21} parent=0 // pred_region
    _
  $region21: #{gpt_forward.21} parent=0 // pred_fallthru
    _

// kernel: gpt_forward.22
$region0: #{gpt_forward.22}
  #allocation0 [shape = 'u32[]', space=smem, size = 0x4, offset = 0x4, fixed_abs, tag = 'smem constant byte address 0x4 - core index']
  #allocation1 [shape = 'u32[144,128]{1,0:T(1,128)}', space=vmem, size = 0x12000, scoped, tag = 'internal scratch']
  %s0 = inlined_call_operand.vmem [shape: bf16[16,128], index: 0, kind: input, shape index: {}]
  %s1 = inlined_call_operand.vmem [shape: bf16[128,32], index: 1, kind: input, shape index: {}]
  %s2 = inlined_call_operand.vmem [shape: f32[1,32], index: 2, kind: input, shape index: {}]
  %s3 = inlined_call_operand.vmem [shape: f32[16,32], index: 3, kind: input, shape index: {}]
  %s4 = inlined_call_operand.vmem [shape: f32[16,32], index: 4, kind: output, shape index: {}]
  %s5 = sld [smem:[#allocation0]]
  $region26: #{gpt_forward.22} parent=0
    _
  %s7 = ssub.s32 1, %s5
  %s8 = scalar_select 0, %s7, %s5
  // Predicated region
  $region2: #{gpt_forward.22} parent=0 // pred_check
    _
  $region3: #{gpt_forward.22} parent=0 // pred_check_branch
    %10 = sbr.rel (0) target = $region5
  $region4: #{gpt_forward.22} parent=0 // pred_region
    _
  $region5: #{gpt_forward.22} parent=0 // pred_fallthru
    _
  // Predicated region
  $region6: #{gpt_forward.22} parent=0 // pred_check
    _
  $region7: #{gpt_forward.22} parent=0 // pred_check_branch
    %12 = sbr.rel (0) target = $region9
  $region8: #{gpt_forward.22} parent=0 // pred_region
    _
  $region9: #{gpt_forward.22} parent=0 // pred_fallthru
    _
  // Predicated region
  $region10: #{gpt_forward.22} parent=0 // pred_check
    _
  $region11: #{gpt_forward.22} parent=0 // pred_check_branch
    %14 = sbr.rel (0) target = $region13
  $region12: #{gpt_forward.22} parent=0 // pred_region
    _
  $region13: #{gpt_forward.22} parent=0 // pred_fallthru
    _
  // Predicated region
  $region14: #{gpt_forward.22} parent=0 // pred_check
    _
  $region15: #{gpt_forward.22} parent=0 // pred_check_branch
    %16 = sbr.rel (0) target = $region17
  $region16: #{gpt_forward.22} parent=0 // pred_region
    _
  $region17: #{gpt_forward.22} parent=0 // pred_fallthru
    _
  %v18 = vld [vmem:[%s0] sm:$0xf]
  %v19 = vld [vmem:[%s0 + $0x4] sm:$0xf]
  %v20 = vld [vmem:[%s1] sm:$0xf]
  %v21 = vld [vmem:[%s1 + $0x4] sm:$0xf]
  %v22 = vld [vmem:[%s1 + $0x8] sm:$0xf]
  %v23 = vld [vmem:[%s1 + $0xc] sm:$0xf]
  %v24 = vld [vmem:[%s1 + $0x10] sm:$0xf]
  %v25 = vld [vmem:[%s1 + $0x14] sm:$0xf]
  %v26 = vld [vmem:[%s1 + $0x18] sm:$0xf]
  %v27 = vld [vmem:[%s1 + $0x1c] sm:$0xf]
  %v28 = vld [vmem:[%s1 + $0x20] sm:$0xf]
  %v29 = vld [vmem:[%s1 + $0x24] sm:$0xf]
  %v30 = vld [vmem:[%s1 + $0x28] sm:$0xf]
  %v31 = vld [vmem:[%s1 + $0x2c] sm:$0xf]
  %v32 = vld [vmem:[%s1 + $0x30] sm:$0xf]
  %v33 = vld [vmem:[%s1 + $0x34] sm:$0xf]
  %v34 = vld [vmem:[%s1 + $0x38] sm:$0xf]
  %v35 = vld [vmem:[%s1 + $0x3c] sm:$0xf]
  %v36 = vld [vmem:[%s2] sm:$0x1]
  %v38 = vlaneseq
  %v39 = vshrl.u32 %v38, 7
  %v40 = vsub.s32 0, %v39
  %v41 = vrot.slane %v36, %v40
  %v45 = vunpack.c.l.b16 %v18
  %v46 = vunpack.c.l.b16 %v19
  %v47 = vpack.c.b16 %v46, %v45
  %v65 = vunpack.c.l.b16 %v20
  %v66 = vunpack.c.l.b16 %v21
  %v67 = vunpack.c.l.b16 %v22
  %v68 = vunpack.c.l.b16 %v23
  %v69 = vunpack.c.l.b16 %v24
  %v70 = vunpack.c.l.b16 %v25
  %v71 = vunpack.c.l.b16 %v26
  %v72 = vunpack.c.l.b16 %v27
  %v73 = vunpack.c.l.b16 %v28
  %v74 = vunpack.c.l.b16 %v29
  %v75 = vunpack.c.l.b16 %v30
  %v76 = vunpack.c.l.b16 %v31
  %v77 = vunpack.c.l.b16 %v32
  %v78 = vunpack.c.l.b16 %v33
  %v79 = vunpack.c.l.b16 %v34
  %v80 = vunpack.c.l.b16 %v35
  %v81 = vpack.c.b16 %v66, %v65
  %v82 = vpack.c.b16 %v68, %v67
  %v83 = vpack.c.b16 %v70, %v69
  %v84 = vpack.c.b16 %v72, %v71
  %v85 = vpack.c.b16 %v74, %v73
  %v86 = vpack.c.b16 %v76, %v75
  %v87 = vpack.c.b16 %v78, %v77
  %v88 = vpack.c.b16 %v80, %v79
  %97 = vmatprep.subr.bf16.mxu0 0
  %98 = vmatpush1.bf16.msra.mxu0 %v88
  %99 = vmatprep.subr.bf16.mxu0 0
  %100 = vmatpush1.bf16.msra.mxu0 %v87
  %101 = vmatprep.subr.bf16.mxu0 0
  %102 = vmatpush1.bf16.msra.mxu0 %v86
  %103 = vmatprep.subr.bf16.mxu0 0
  %104 = vmatpush1.bf16.msra.mxu0 %v85
  %105 = vmatprep.subr.bf16.mxu0 0
  %106 = vmatpush1.bf16.msra.mxu0 %v84
  %107 = vmatprep.subr.bf16.mxu0 0
  %108 = vmatpush1.bf16.msra.mxu0 %v83
  %109 = vmatprep.subr.bf16.mxu0 0
  %110 = vmatpush1.bf16.msra.mxu0 %v82
  %111 = vmatprep.subr.bf16.mxu0 0
  %112 = vmatpush1.bf16.msra.mxu0 %v81
  %113 = vmatprep.subr.bf16.mxu0 0
  %114 = vmatpush2.bf16.msra.mxu0 0
  %115 = vmatprep.subr.bf16.mxu0 0
  %116 = vmatpush2.bf16.msra.mxu0 0
  %117 = vmatprep.subr.bf16.mxu0 0
  %118 = vmatpush2.bf16.msra.mxu0 0
  %119 = vmatprep.subr.bf16.mxu0 0
  %120 = vmatpush2.bf16.msra.mxu0 0
  %121 = vmatprep.subr.bf16.mxu0 0
  %122 = vmatpush2.bf16.msra.mxu0 0
  %123 = vmatprep.subr.bf16.mxu0 0
  %124 = vmatpush2.bf16.msra.mxu0 0
  %125 = vmatprep.subr.bf16.mxu0 0
  %126 = vmatpush2.bf16.msra.mxu0 0
  %127 = vmatprep.subr.bf16.mxu0 0
  %128 = vmatpush2.bf16.msra.mxu0 0
  %129 = vmatprep.mubr.bf16.mxu0 0
  %130 = vmatmul.mubr.bf16.gmra.mxu0 %v47
  %v131 = vpop.f32.mrf.mxu0
  %v132 = vadd.f32 %v41, %v131
  %v133 = vpop.f32.mrf.mxu0
  %v134 = vpop.f32.mrf.mxu0
  %v135 = vadd.f32 %v41, %v134
  %v136 = vpop.f32.mrf.mxu0
  %137 = vdwg.mxu0
  %v138 = vld [vmem:[%s3] sm:$0xff]
  %v139 = vld [vmem:[%s3 + $0x8] sm:$0xff]
  %v140 = vadd.f32 %v132, %v138
  %v141 = vadd.f32 %v135, %v139
  %vm142 = vcmask 261120
  %143 = vst.msk [vmem:[%s4] sm:$0xff] %vm142, %v140
  %144 = vst.msk [vmem:[%s4 + $0x8] sm:$0xff] %vm142, %v141
  // Predicated region
  $region18: #{gpt_forward.22} parent=0 // pred_check
    _
  $region19: #{gpt_forward.22} parent=0 // pred_check_branch
    %146 = sbr.rel (0) target = $region21
  $region20: #{gpt_forward.22} parent=0 // pred_region
    _
  $region21: #{gpt_forward.22} parent=0 // pred_fallthru
    _
  // Predicated region
  $region22: #{gpt_forward.22} parent=0 // pred_check
    _
  $region23: #{gpt_forward.22} parent=0 // pred_check_branch
    %148 = sbr.rel (0) target = $region25
  $region24: #{gpt_forward.22} parent=0 // pred_region
    _
  $region25: #{gpt_forward.22} parent=0 // pred_fallthru
    _

// kernel: gpt_forward.31
$region0: #{gpt_forward.31}
  #allocation0 [shape = 'u32[]', space=smem, size = 0x4, offset = 0x4, fixed_abs, tag = 'smem constant byte address 0x4 - core index']
  #allocation1 [shape = 'u32[144,128]{1,0:T(1,128)}', space=vmem, size = 0x12000, scoped, tag = 'internal scratch']
  %s0 = inlined_call_operand.vmem [shape: bf16[16,32], index: 0, kind: input, shape index: {}]
  %s1 = inlined_call_operand.vmem [shape: bf16[128,32], index: 1, kind: input, shape index: {}]
  %s2 = inlined_call_operand.hbm [shape: f32[16,128], index: 2, kind: output, shape index: {}]
  %s3 = sld [smem:[#allocation0]]
  $region18: #{gpt_forward.31} parent=0
    _
  %s5 = ssub.s32 1, %s3
  %s6 = scalar_select 0, %s5, %s3
  $region1: #{gpt_forward.31} parent=0
    #allocation2 [shape = 'u8[8192]{0}', space=vmem, size = 0x2000, scoped, tag = 'output window, operand 0, single buffered']
    #allocation3 [shape = 's32[1]{0}', space=sflag, size = 0x4, scoped, tag = 'scoped memory for gpt_forward.31']
    %7 = vsyncpa [#allocation3], 0
    // Predicated region
    $region2: #{gpt_forward.31} parent=1 // pred_check
      _
    $region3: #{gpt_forward.31} parent=1 // pred_check_branch
      %9 = sbr.rel (0) target = $region5
    $region4: #{gpt_forward.31} parent=1 // pred_region
      _
    $region5: #{gpt_forward.31} parent=1 // pred_fallthru
      _
    // Predicated region
    $region6: #{gpt_forward.31} parent=1 // pred_check
      _
    $region7: #{gpt_forward.31} parent=1 // pred_check_branch
      %11 = sbr.rel (0) target = $region9
    $region8: #{gpt_forward.31} parent=1 // pred_region
      _
    $region9: #{gpt_forward.31} parent=1 // pred_fallthru
      _
    %v13 = vld [vmem:[%s0] sm:$0xf]
    %v14 = vld [vmem:[%s0 + $0x4] sm:$0xf]
    %v15 = vld [vmem:[%s1] sm:$0xf]
    %v16 = vld [vmem:[%s1 + $0x4] sm:$0xf]
    %v17 = vld [vmem:[%s1 + $0x8] sm:$0xf]
    %v18 = vld [vmem:[%s1 + $0xc] sm:$0xf]
    %v19 = vld [vmem:[%s1 + $0x10] sm:$0xf]
    %v20 = vld [vmem:[%s1 + $0x14] sm:$0xf]
    %v21 = vld [vmem:[%s1 + $0x18] sm:$0xf]
    %v22 = vld [vmem:[%s1 + $0x1c] sm:$0xf]
    %v23 = vld [vmem:[%s1 + $0x20] sm:$0xf]
    %v24 = vld [vmem:[%s1 + $0x24] sm:$0xf]
    %v25 = vld [vmem:[%s1 + $0x28] sm:$0xf]
    %v26 = vld [vmem:[%s1 + $0x2c] sm:$0xf]
    %v27 = vld [vmem:[%s1 + $0x30] sm:$0xf]
    %v28 = vld [vmem:[%s1 + $0x34] sm:$0xf]
    %v29 = vld [vmem:[%s1 + $0x38] sm:$0xf]
    %v30 = vld [vmem:[%s1 + $0x3c] sm:$0xf]
    %v33 = vunpack.c.l.b16 %v13
    %v34 = vunpack.c.l.b16 %v14
    %v35 = vpack.c.b16 %v34, %v33
    %v52 = vunpack.c.l.b16 %v15
    %v53 = vunpack.c.l.b16 %v16
    %v54 = vunpack.c.l.b16 %v17
    %v55 = vunpack.c.l.b16 %v18
    %v56 = vunpack.c.l.b16 %v19
    %v57 = vunpack.c.l.b16 %v20
    %v58 = vunpack.c.l.b16 %v21
    %v59 = vunpack.c.l.b16 %v22
    %v60 = vunpack.c.l.b16 %v23
    %v61 = vunpack.c.l.b16 %v24
    %v62 = vunpack.c.l.b16 %v25
    %v63 = vunpack.c.l.b16 %v26
    %v64 = vunpack.c.l.b16 %v27
    %v65 = vunpack.c.l.b16 %v28
    %v66 = vunpack.c.l.b16 %v29
    %v67 = vunpack.c.l.b16 %v30
    %v68 = vpack.c.b16 %v53, %v52
    %v69 = vpack.c.b16 %v55, %v54
    %v70 = vpack.c.b16 %v57, %v56
    %v71 = vpack.c.b16 %v59, %v58
    %v72 = vpack.c.b16 %v61, %v60
    %v73 = vpack.c.b16 %v63, %v62
    %v74 = vpack.c.b16 %v65, %v64
    %v75 = vpack.c.b16 %v67, %v66
    %vm76 = vcmask 261120
    %v78 = vsel %vm76, %v35, 0
    %v81 = vsel %vm76, %v68, 0
    %v84 = vsel %vm76, %v69, 0
    %v87 = vsel %vm76, %v70, 0
    %v90 = vsel %vm76, %v71, 0
    %v93 = vsel %vm76, %v72, 0
    %v96 = vsel %vm76, %v73, 0
    %v99 = vsel %vm76, %v74, 0
    %v102 = vsel %vm76, %v75, 0
    %104 = vmatprep.subr.bf16.mxu0 0
    %105 = vmatpush1.bf16.xpose.msra.mxu0 %v102
    %106 = vmatprep.subr.bf16.mxu0 0
    %107 = vmatpush1.bf16.xpose.msra.mxu0 %v99
    %108 = vmatprep.subr.bf16.mxu0 0
    %109 = vmatpush1.bf16.xpose.msra.mxu0 %v96
    %110 = vmatprep.subr.bf16.mxu0 0
    %111 = vmatpush1.bf16.xpose.msra.mxu0 %v93
    %112 = vmatprep.subr.bf16.mxu0 0
    %113 = vmatpush1.bf16.xpose.msra.mxu0 %v90
    %114 = vmatprep.subr.bf16.mxu0 0
    %115 = vmatpush1.bf16.xpose.msra.mxu0 %v87
    %116 = vmatprep.subr.bf16.mxu0 0
    %117 = vmatpush1.bf16.xpose.msra.mxu0 %v84
    %118 = vmatprep.subr.bf16.mxu0 0
    %119 = vmatpush1.bf16.xpose.msra.mxu0 %v81
    %120 = vmatprep.subr.bf16.mxu0 0
    %121 = vmatpush2.bf16.xpose.msra.mxu0 0
    %122 = vmatprep.subr.bf16.mxu0 0
    %123 = vmatpush2.bf16.xpose.msra.mxu0 0
    %124 = vmatprep.subr.bf16.mxu0 0
    %125 = vmatpush2.bf16.xpose.msra.mxu0 0
    %126 = vmatprep.subr.bf16.mxu0 0
    %127 = vmatpush2.bf16.xpose.msra.mxu0 0
    %128 = vmatprep.subr.bf16.mxu0 0
    %129 = vmatpush2.bf16.xpose.msra.mxu0 0
    %130 = vmatprep.subr.bf16.mxu0 0
    %131 = vmatpush2.bf16.xpose.msra.mxu0 0
    %132 = vmatprep.subr.bf16.mxu0 0
    %133 = vmatpush2.bf16.xpose.msra.mxu0 0
    %134 = vmatprep.subr.bf16.mxu0 0
    %135 = vmatpush2.bf16.xpose.msra.mxu0 0
    %136 = vmatprep.mubr.bf16.mxu0 0
    %137 = vmatmul.mubr.bf16.gmra.mxu0 %v78
    %v138 = vpop.f32.mrf.mxu0
    %v139 = vadd.f32 0.0, %v138
    %v140 = vpop.f32.mrf.mxu0
    %v141 = vpop.f32.mrf.mxu0
    %v142 = vadd.f32 0.0, %v141
    %v143 = vpop.f32.mrf.mxu0
    %144 = vdwg.mxu0
    %145 = vst [vmem:[#allocation2] sm:$0xff] %v139
    %146 = vst [vmem:[#allocation2 + $0x8] sm:$0xff] %v142
    // Predicated region
    $region10: #{gpt_forward.31} parent=1 // pred_check
      _
    $region11: #{gpt_forward.31} parent=1 // pred_check_branch
      %148 = sbr.rel (0) target = $region13
    $region12: #{gpt_forward.31} parent=1 // pred_region
      %s150 = ssub.s32 256, 256
      %151 = vsyncadd [#allocation3], %s150
      %s152 = sshll.u32 [#allocation2], 4
      %s153 = int_to_ptr.vmem [resolvable:$true] %s152
      %158 = dma.vmem_to_hbm [thread:$0]  %s153, 256, %s2, [#allocation3], 128, 128, 8
    $region13: #{gpt_forward.31} parent=1 // pred_fallthru
      _
    // Predicated region
    $region14: #{gpt_forward.31} parent=1 // pred_check
      _
    $region15: #{gpt_forward.31} parent=1 // pred_check_branch
      %160 = sbr.rel (0) target = $region17
    $region16: #{gpt_forward.31} parent=1 // pred_region
      %161 = dma.done [#allocation3], 256
    $region17: #{gpt_forward.31} parent=1 // pred_fallthru
      _
    %162 = vsyncpa [#allocation3], 1

</llo_original>
